<compile_context>
chip_gen: v7x
topology: tpu7x:2x2x1
jax: 0.10.0
libtpu: 0.0.40
codegen_flags: <defaults>
</compile_context>

<pallas_src>
import functools

import jax
import jax.numpy as jnp
from jax.experimental import pallas as pl
from jax.experimental.pallas import tpu as pltpu


OUT_PAD = 128          # lane-dense width for hidden/output activations
NEG_INF = -1e9         # finite "-inf" for padded logit lanes


def dnn_kernel(x_ref, w_ref, b_ref, y_ref, logits_ref, probs_ref, loss_ref,
               *, dims):
    d_in_pad, h1, h2, out_dim, out_pad = dims

    x = x_ref[...]                                           # (T, d_in_pad) bf16
    w1 = w_ref[0:d_in_pad, :]                                # (d_in_pad, 128) bf16
    w2 = w_ref[d_in_pad:d_in_pad + out_pad, :]               # (128, 128) bf16
    w3 = w_ref[d_in_pad + out_pad:d_in_pad + 2 * out_pad, :] # (128, 128) bf16
    b1 = b_ref[0:1, :]                                       # (1, 128) f32
    b2 = b_ref[1:2, :]
    b3 = b_ref[2:3, :]   # real bias in lanes [0, out_dim); NEG_INF in pad lanes

    # Hidden layer 1: Linear -> Dropout(eval, identity) -> Tanh
    # TODO(synk): training-mode dropout would need pltpu.prng_random_bits masking.
    a1 = jnp.tanh(
        jnp.dot(x, w1, preferred_element_type=jnp.float32) + b1)
    # Hidden layer 2: Linear -> Dropout -> Tanh  (bf16 MXU operands, f32 acc)
    a2 = jnp.tanh(
        jnp.dot(a1.astype(jnp.bfloat16), w2,
                preferred_element_type=jnp.float32) + b2)
    # Output layer: Linear. Padded lanes get NEG_INF from b3 -> exact softmax.
    logits = (jnp.dot(a2.astype(jnp.bfloat16), w3,
                      preferred_element_type=jnp.float32) + b3)
    logits_ref[...] = logits                                 # lane-dense store

    # Softmax(dim=1): padded lanes contribute exp(~-1e9) == 0 to the sum.
    m = jnp.max(logits, axis=1, keepdims=True)
    e = jnp.exp(logits - m)
    s = jnp.sum(e, axis=1, keepdims=True)
    probs_ref[...] = e * pl.reciprocal(s, approx=True)       # EUP reciprocal

    # Per-example soft-target cross entropy (mean reduction done in wrapper).
    log_probs = (logits - m) - jnp.log(s)
    loss_ref[...] = -jnp.sum(y_ref[...] * log_probs[:, :out_dim],
                             axis=1, keepdims=True)          # (T, 1)


@functools.partial(jax.jit, static_argnames=("tile_b",))
def dnn_forward(x, params, labels, *, tile_b=512):
    """Fused DNN forward. Returns [loss, logits, probs] (like the torch module)."""
    w1, b1, w2, b2, w3, b3 = params       # weights (in, out), biases (1, out), f32
    B, d_in = x.shape
    h1 = w1.shape[1]
    h2 = w2.shape[1]
    out_dim = w3.shape[1]
    assert h1 <= OUT_PAD and h2 <= OUT_PAD and out_dim <= OUT_PAD

    # ---- static padding / tiling decisions --------------------------------
    d_in_pad = max(16, ((d_in + 15) // 16) * 16)      # bf16 sublane alignment
    tile_b = max(16, (int(tile_b) // 16) * 16)
    if B <= tile_b:
        tile_b = max(16, ((B + 15) // 16) * 16)
    B_pad = ((B + tile_b - 1) // tile_b) * tile_b
    num_tiles = B_pad // tile_b

    # ---- pack weights (zero-padded, bf16) and biases (f32) ----------------
    w1p = jnp.zeros((d_in_pad, OUT_PAD), jnp.float32).at[:d_in, :h1].set(w1)
    w2p = jnp.zeros((OUT_PAD, OUT_PAD), jnp.float32).at[:h1, :h2].set(w2)
    w3p = jnp.zeros((OUT_PAD, OUT_PAD), jnp.float32).at[:h2, :out_dim].set(w3)
    w_packed = jnp.concatenate([w1p, w2p, w3p], axis=0).astype(jnp.bfloat16)

    b_packed = jnp.zeros((8, OUT_PAD), jnp.float32)
    b_packed = b_packed.at[0, :h1].set(b1[0])
    b_packed = b_packed.at[1, :h2].set(b2[0])
    b_packed = b_packed.at[2, :].set(NEG_INF)
    b_packed = b_packed.at[2, :out_dim].set(b3[0])

    # ---- pad batch (zero rows / zero labels contribute 0 to the loss) -----
    x_p = jnp.zeros((B_pad, d_in_pad), jnp.bfloat16)
    x_p = x_p.at[:B, :d_in].set(x.astype(jnp.bfloat16))
    y_p = jnp.zeros((B_pad, out_dim), jnp.float32)
    y_p = y_p.at[:B].set(labels.astype(jnp.float32))

    kernel = functools.partial(
        dnn_kernel, dims=(d_in_pad, h1, h2, out_dim, OUT_PAD))

    logits_pad, probs_pad, per_ex_loss = pl.pallas_call(
        kernel,
        out_shape=(
            jax.ShapeDtypeStruct((B_pad, OUT_PAD), jnp.float32),  # logits (padded)
            jax.ShapeDtypeStruct((B_pad, OUT_PAD), jnp.float32),  # softmax (padded)
            jax.ShapeDtypeStruct((B_pad, 1), jnp.float32),        # per-example CE
        ),
        grid=(num_tiles,),
        in_specs=[
            pl.BlockSpec((tile_b, d_in_pad), lambda i: (i, 0)),         # x tile
            pl.BlockSpec(w_packed.shape, lambda i: (0, 0)),             # weights (resident)
            pl.BlockSpec(b_packed.shape, lambda i: (0, 0)),             # biases (resident)
            pl.BlockSpec((tile_b, out_dim), lambda i: (i, 0)),          # labels tile
        ],
        out_specs=(
            pl.BlockSpec((tile_b, OUT_PAD), lambda i: (i, 0)),
            pl.BlockSpec((tile_b, OUT_PAD), lambda i: (i, 0)),
            pl.BlockSpec((tile_b, 1), lambda i: (i, 0)),
        ),
        compiler_params=pltpu.CompilerParams(
            dimension_semantics=("parallel",),
            vmem_limit_bytes=32 * 1024 * 1024,
        ),
    )(x_p, w_packed, b_packed, y_p)

    logits = logits_pad[:B, :out_dim]
    probs = probs_pad[:B, :out_dim]
    loss = jnp.sum(per_ex_loss[:B, 0]) / B   # CrossEntropyLoss(reduction='mean')
    return [loss, logits, probs]


def init_params(key, input_dim, hidden_dims, num_labels):
    """Deterministic Linear params; weights stored as (in, out)."""
    out_dim = 1 if num_labels == 2 else num_labels
    dims = [input_dim] + list(hidden_dims) + [out_dim]
    params = []
    for i in range(len(dims) - 1):
        key, kw, kb = jax.random.split(key, 3)
        fan_in = dims[i]
        bound = 1.0 / jnp.sqrt(fan_in)
        w = jax.random.uniform(kw, (dims[i], dims[i + 1]),
                               minval=-bound, maxval=bound, dtype=jnp.float32)
        b = jax.random.uniform(kb, (1, dims[i + 1]),
                               minval=-bound, maxval=bound, dtype=jnp.float32)
        params += [w, b]
    return tuple(params)


def dnn_reference(x, params, labels):
    """Pure-JAX f32 reference of the same forward pass."""
    w1, b1, w2, b2, w3, b3 = params
    a1 = jnp.tanh(x @ w1 + b1)
    a2 = jnp.tanh(a1 @ w2 + b2)
    logits = a2 @ w3 + b3
    probs = jax.nn.softmax(logits, axis=1)
    logp = jax.nn.log_softmax(logits, axis=1)
    loss = -jnp.mean(jnp.sum(labels * logp, axis=1))
    return loss, logits, probs


if __name__ == "__main__":
    B = 1024
    INPUT_DIM = 32
    HIDDEN_DIMS = [64, 32]
    NUM_LABELS = 3   # multi_class -> Softmax output + CrossEntropyLoss

    key = jax.random.PRNGKey(0)
    k_x, k_y, k_p = jax.random.split(key, 3)

    x = jax.random.normal(k_x, (B, INPUT_DIM), dtype=jnp.float32)
    label_ids = jax.random.randint(k_y, (B,), 0, NUM_LABELS)
    labels = jax.nn.one_hot(label_ids, NUM_LABELS, dtype=jnp.float32)

    params = init_params(k_p, INPUT_DIM, HIDDEN_DIMS, NUM_LABELS)

    loss, logits, probs = dnn_forward(x, params, labels, tile_b=256)
    jax.block_until_ready((loss, logits, probs))

    assert logits.shape == (B, NUM_LABELS)
    assert probs.shape == (B, NUM_LABELS)
    assert loss.shape == ()

    # Loose-tolerance check vs f32 reference (kernel matmuls run in bf16).
    ref_loss, ref_logits, ref_probs = dnn_reference(x, params, labels)
    assert float(jnp.max(jnp.abs(probs - ref_probs))) < 0.1
    assert abs(float(loss) - float(ref_loss)) < 0.15 * (abs(float(ref_loss)) + 1e-6)

    print("KERNEL_OK")
</pallas_src>

<mosaic_0001>
module attributes {stable_mosaic.version = 11 : i64} {
  func.func @dnn_kernel(%arg0: i32, %arg1: memref<256x32xbf16, #tpu.memory_space<vmem>>, %arg2: memref<288x128xbf16, #tpu.memory_space<vmem>>, %arg3: memref<8x128xf32, #tpu.memory_space<vmem>>, %arg4: memref<256x3xf32, #tpu.memory_space<vmem>>, %arg5: memref<256x128xf32, #tpu.memory_space<vmem>>, %arg6: memref<256x128xf32, #tpu.memory_space<vmem>>, %arg7: memref<256x1xf32, #tpu.memory_space<vmem>>) attributes {dimension_semantics = [#tpu.dimension_semantics<parallel>], iteration_bounds = array<i64: 4>, scalar_prefetch = 0 : i64, scratch_operands = 0 : i64, tpu.core_type = #tpu.core_type<tc>, window_params = [{transform_indices = @transform_0, window_bounds = array<i64: 256, 32>}, {pipeline_mode = #tpu.pipeline_mode<synchronous>, transform_indices = @transform_1, window_bounds = array<i64: 288, 128>}, {pipeline_mode = #tpu.pipeline_mode<synchronous>, transform_indices = @transform_2, window_bounds = array<i64: 8, 128>}, {transform_indices = @transform_3, window_bounds = array<i64: 256, 3>}, {transform_indices = @transform_4, window_bounds = array<i64: 256, 128>}, {transform_indices = @transform_5, window_bounds = array<i64: 256, 128>}, {transform_indices = @transform_6, window_bounds = array<i64: 256, 1>}]} {
    %c0 = arith.constant 0 : index
    %c0_0 = arith.constant 0 : index
    %0 = vector.load %arg1[%c0, %c0_0] : memref<256x32xbf16, #tpu.memory_space<vmem>>, vector<256x32xbf16>
    %c0_1 = arith.constant 0 : index
    %c0_2 = arith.constant 0 : index
    %1 = vector.load %arg2[%c0_1, %c0_2] : memref<288x128xbf16, #tpu.memory_space<vmem>>, vector<32x128xbf16>
    %c32 = arith.constant 32 : index
    %c0_3 = arith.constant 0 : index
    %2 = vector.load %arg2[%c32, %c0_3] : memref<288x128xbf16, #tpu.memory_space<vmem>>, vector<128x128xbf16>
    %c160 = arith.constant 160 : index
    %c0_4 = arith.constant 0 : index
    %3 = vector.load %arg2[%c160, %c0_4] : memref<288x128xbf16, #tpu.memory_space<vmem>>, vector<128x128xbf16>
    %c0_5 = arith.constant 0 : index
    %c0_6 = arith.constant 0 : index
    %4 = vector.load %arg3[%c0_5, %c0_6] : memref<8x128xf32, #tpu.memory_space<vmem>>, vector<1x128xf32>
    %c1 = arith.constant 1 : index
    %c0_7 = arith.constant 0 : index
    %5 = vector.load %arg3[%c1, %c0_7] : memref<8x128xf32, #tpu.memory_space<vmem>>, vector<1x128xf32>
    %c2 = arith.constant 2 : index
    %c0_8 = arith.constant 0 : index
    %6 = vector.load %arg3[%c2, %c0_8] : memref<8x128xf32, #tpu.memory_space<vmem>>, vector<1x128xf32>
    %cst = arith.constant dense<0.000000e+00> : vector<256x128xf32>
    %7 = tpu.matmul %0, %1, %cst {dimension_numbers = #tpu.dot_dimension_numbers<[1], [0], [0], [1], [0, 0, 1, 1], [], []>} : vector<256x32xbf16>, vector<32x128xbf16>, vector<256x128xf32> -> vector<256x128xf32>
    %8 = vector.broadcast %4 : vector<1x128xf32> to vector<256x128xf32>
    %9 = arith.addf %7, %8 : vector<256x128xf32>
    %10 = math.tanh %9 : vector<256x128xf32>
    %11 = arith.truncf %10 : vector<256x128xf32> to vector<256x128xbf16>
    %cst_9 = arith.constant dense<0.000000e+00> : vector<256x128xf32>
    %12 = tpu.matmul %11, %2, %cst_9 {dimension_numbers = #tpu.dot_dimension_numbers<[1], [0], [0], [1], [0, 0, 1, 1], [], []>} : vector<256x128xbf16>, vector<128x128xbf16>, vector<256x128xf32> -> vector<256x128xf32>
    %13 = vector.broadcast %5 : vector<1x128xf32> to vector<256x128xf32>
    %14 = arith.addf %12, %13 : vector<256x128xf32>
    %15 = math.tanh %14 : vector<256x128xf32>
    %16 = arith.truncf %15 : vector<256x128xf32> to vector<256x128xbf16>
    %cst_10 = arith.constant dense<0.000000e+00> : vector<256x128xf32>
    %17 = tpu.matmul %16, %3, %cst_10 {dimension_numbers = #tpu.dot_dimension_numbers<[1], [0], [0], [1], [0, 0, 1, 1], [], []>} : vector<256x128xbf16>, vector<128x128xbf16>, vector<256x128xf32> -> vector<256x128xf32>
    %18 = vector.broadcast %6 : vector<1x128xf32> to vector<256x128xf32>
    %19 = arith.addf %17, %18 : vector<256x128xf32>
    %c0_11 = arith.constant 0 : index
    %c0_12 = arith.constant 0 : index
    %20 = vector.load %arg5[%c0_11, %c0_12] : memref<256x128xf32, #tpu.memory_space<vmem>>, vector<256x128xf32>
    tpu.vector_store %arg5[%c0_11, %c0_12], %19 {strides = array<i32>} : memref<256x128xf32, #tpu.memory_space<vmem>>, vector<256x128xf32>,
    %cst_13 = arith.constant dense<0xFF800000> : vector<256xf32>
    %21 = vector.multi_reduction <maximumf>, %19, %cst_13 [1] : vector<256x128xf32> to vector<256xf32>
    %22 = vector.shape_cast %21 : vector<256xf32> to vector<256x1xf32>
    %23 = vector.broadcast %22 : vector<256x1xf32> to vector<256x128xf32>
    %24 = arith.subf %19, %23 : vector<256x128xf32>
    %25 = math.exp %24 : vector<256x128xf32>
    %cst_14 = arith.constant dense<0.000000e+00> : vector<256xf32>
    %26 = vector.multi_reduction <add>, %25, %cst_14 [1] : vector<256x128xf32> to vector<256xf32>
    %27 = vector.shape_cast %26 : vector<256xf32> to vector<256x1xf32>
    %28 = tpu.reciprocal %27 {approx = true} : vector<256x1xf32> -> vector<256x1xf32>
    %29 = vector.broadcast %28 : vector<256x1xf32> to vector<256x128xf32>
    %30 = arith.mulf %25, %29 : vector<256x128xf32>
    %c0_15 = arith.constant 0 : index
    %c0_16 = arith.constant 0 : index
    %31 = vector.load %arg6[%c0_15, %c0_16] : memref<256x128xf32, #tpu.memory_space<vmem>>, vector<256x128xf32>
    tpu.vector_store %arg6[%c0_15, %c0_16], %30 {strides = array<i32>} : memref<256x128xf32, #tpu.memory_space<vmem>>, vector<256x128xf32>,
    %32 = vector.broadcast %22 : vector<256x1xf32> to vector<256x128xf32>
    %33 = arith.subf %19, %32 : vector<256x128xf32>
    %34 = math.log %27 : vector<256x1xf32>
    %35 = vector.broadcast %34 : vector<256x1xf32> to vector<256x128xf32>
    %36 = arith.subf %33, %35 : vector<256x128xf32>
    %c0_17 = arith.constant 0 : index
    %c0_18 = arith.constant 0 : index
    %37 = vector.load %arg4[%c0_17, %c0_18] : memref<256x3xf32, #tpu.memory_space<vmem>>, vector<256x3xf32>
    %38 = vector.extract_strided_slice %36 {offsets = [0, 0], sizes = [256, 3], strides = [1, 1]} : vector<256x128xf32> to vector<256x3xf32>
    %39 = arith.mulf %37, %38 : vector<256x3xf32>
    %cst_19 = arith.constant dense<0.000000e+00> : vector<256xf32>
    %40 = vector.multi_reduction <add>, %39, %cst_19 [1] : vector<256x3xf32> to vector<256xf32>
    %41 = vector.shape_cast %40 : vector<256xf32> to vector<256x1xf32>
    %cst_20 = arith.constant 0.000000e+00 : f32
    %42 = vector.broadcast %cst_20 : f32 to vector<256x1xf32>
    %43 = arith.subf %42, %41 : vector<256x1xf32>
    %c0_21 = arith.constant 0 : index
    %c0_22 = arith.constant 0 : index
    %44 = vector.load %arg7[%c0_21, %c0_22] : memref<256x1xf32, #tpu.memory_space<vmem>>, vector<256x1xf32>
    tpu.vector_store %arg7[%c0_21, %c0_22], %43 {strides = array<i32>} : memref<256x1xf32, #tpu.memory_space<vmem>>, vector<256x1xf32>,
    return
  }
  func.func @transform_0(%arg0: i32) -> (i32, i32) {
    %c0_i32 = arith.constant 0 : i32
    %c0_i32_0 = arith.constant 0 : i32
    return %arg0, %c0_i32 : i32, i32
  }
  func.func @transform_1(%arg0: i32) -> (i32, i32) {
    %c0_i32 = arith.constant 0 : i32
    %c0_i32_0 = arith.constant 0 : i32
    %c0_i32_1 = arith.constant 0 : i32
    return %c0_i32, %c0_i32_0 : i32, i32
  }
  func.func @transform_2(%arg0: i32) -> (i32, i32) {
    %c0_i32 = arith.constant 0 : i32
    %c0_i32_0 = arith.constant 0 : i32
    %c0_i32_1 = arith.constant 0 : i32
    return %c0_i32, %c0_i32_0 : i32, i32
  }
  func.func @transform_3(%arg0: i32) -> (i32, i32) {
    %c0_i32 = arith.constant 0 : i32
    %c0_i32_0 = arith.constant 0 : i32
    return %arg0, %c0_i32 : i32, i32
  }
  func.func @transform_4(%arg0: i32) -> (i32, i32) {
    %c0_i32 = arith.constant 0 : i32
    %c0_i32_0 = arith.constant 0 : i32
    return %arg0, %c0_i32 : i32, i32
  }
  func.func @transform_5(%arg0: i32) -> (i32, i32) {
    %c0_i32 = arith.constant 0 : i32
    %c0_i32_0 = arith.constant 0 : i32
    return %arg0, %c0_i32 : i32, i32
  }
  func.func @transform_6(%arg0: i32) -> (i32, i32) {
    %c0_i32 = arith.constant 0 : i32
    %c0_i32_0 = arith.constant 0 : i32
    return %arg0, %c0_i32 : i32, i32
  }
}

</mosaic_0001>

<llo_original>
// kernel: dnn_forward.1
$region0: #{dnn_forward.1}
  #allocation0 [shape = 'u32[]', space=smem, size = 0x4, offset = 0x4, fixed_abs, tag = 'smem constant byte address 0x4 - core index']
  #allocation1 [shape = 'u32[144,128]{1,0:T(1,128)}', space=vmem, size = 0x12000, scoped, tag = 'internal scratch']
  %s0 = inlined_call_operand.vmem [shape: bf16[1024,32], index: 0, kind: input, shape index: {}]
  %s1 = inlined_call_operand.vmem [shape: bf16[288,128], index: 1, kind: input, shape index: {}]
  %s2 = inlined_call_operand.vmem [shape: f32[8,128], index: 2, kind: input, shape index: {}]
  %s3 = inlined_call_operand.vmem [shape: f32[1024,3], index: 3, kind: input, shape index: {}]
  %s4 = inlined_call_operand.vmem [shape: f32[1024,128], index: 4, kind: output, shape index: {0}]
  %s5 = inlined_call_operand.vmem [shape: f32[1024,128], index: 5, kind: output, shape index: {1}]
  %s6 = inlined_call_operand.vmem [shape: f32[1024,1], index: 6, kind: output, shape index: {2}]
  %7 = xla_tuple %s4, %s5, %s6
  %s8 = sld [smem:[#allocation0]]
  $region65: #{dnn_forward.1} parent=0
    _
  %s10 = ssub.s32 1, %s8
  %s11 = scalar_select 0, %s10, %s8
  loop: start=0, step=1, limit=6
  $region2: #{dnn_forward.1} parent=0 // loop_pre_header
    _
  $region3: #{dnn_forward.1} parent=0 // loop_header
    %s13 = sphi 0, %s17
    %p14 = scmp.ge.s32.totalorder %s13, 6
    %s23 = sphi 0, %s25
    %s26 = sphi 0, %s23
    %s27 = sphi 0, %s26
    %s43 = sphi 0, %s27
    %s47 = sphi 0, %s47
    %s49 = sphi 0, %s47
    %s50 = sphi 0, %s49
    %s64 = sphi 0, %s50
    %s68 = sphi 0, %s68
    %s70 = sphi 0, %s68
    %s71 = sphi 0, %s70
    %s85 = sphi 0, %s71
    %s91 = sphi 0, %s93
    %s94 = sphi 0, %s91
    %s95 = sphi 0, %s94
    %s111 = sphi 0, %s95
    %s117 = sphi 0, %s119
    %s120 = sphi 0, %s117
    %s121 = sphi 0, %s120
    %s137 = sphi 0, %s121
    %s143 = sphi 0, %s145
    %s146 = sphi 0, %s143
    %s147 = sphi 0, %s146
    %s163 = sphi 0, %s147
    %s169 = sphi 0, %s171
    %s172 = sphi 0, %s169
    %s173 = sphi 0, %s172
    %s189 = sphi 0, %s173
  $region4: #{dnn_forward.1} parent=0 // loop_header_branch
    %16 = sbr.rel (%p14) target = $region8
  $region5: #{dnn_forward.1} parent=0 // loop_body
    %s18 = ssub.s32 %s13, 1
    %s19 = ssub.s32 %s13, 2
    %s20 = sadd.s32 %s13, 1
    %s21 = ssub.s32 %s13, %s20
    %p22 = scmp.eq.s32.totalorder %s21, 0
    %s24 = sadd.s32 %s23, 1
    %s25 = scalar_select %p22, %s23, %s24
    %p28 = pneg %p22
    %p29 = scmp.eq.s32.totalorder %s13, 3
    %p30 = por %p28, %p29
    %p31 = scmp.ne.s32.totalorder %s23, %s26
    %p32 = scmp.eq.s32.totalorder %s13, 0
    %p33 = por %p31, %p32
    %p34 = scmp.ne.s32.totalorder %s23, %s26
    %p35 = scmp.eq.s32.totalorder %s18, 3
    %p36 = por %p34, %p35
    %p37 = scmp.ne.s32.totalorder %s26, %s27
    %p38 = scmp.eq.s32.totalorder %s18, 0
    %p39 = por %p37, %p38
    %p40 = scmp.ne.s32.totalorder %s26, %s27
    %p41 = scmp.eq.s32.totalorder %s19, 3
    %p42 = por %p40, %p41
    %p44 = scmp.ne.s32.totalorder %s27, %s43
    %p45 = scmp.eq.s32.totalorder %s19, 0
    %p46 = por %p44, %p45
    %s48 = sadd.s32 %s47, 1
    %p51 = scmp.eq.s32.totalorder %s13, 3
    %p52 = scmp.ne.s32.totalorder %s47, %s49
    %p53 = scmp.eq.s32.totalorder %s13, 0
    %p54 = por %p52, %p53
    %p55 = scmp.ne.s32.totalorder %s47, %s49
    %p56 = scmp.eq.s32.totalorder %s18, 3
    %p57 = por %p55, %p56
    %p58 = scmp.ne.s32.totalorder %s49, %s50
    %p59 = scmp.eq.s32.totalorder %s18, 0
    %p60 = por %p58, %p59
    %p61 = scmp.ne.s32.totalorder %s49, %s50
    %p62 = scmp.eq.s32.totalorder %s19, 3
    %p63 = por %p61, %p62
    %p65 = scmp.ne.s32.totalorder %s50, %s64
    %p66 = scmp.eq.s32.totalorder %s19, 0
    %p67 = por %p65, %p66
    %s69 = sadd.s32 %s68, 1
    %p72 = scmp.eq.s32.totalorder %s13, 3
    %p73 = scmp.ne.s32.totalorder %s68, %s70
    %p74 = scmp.eq.s32.totalorder %s13, 0
    %p75 = por %p73, %p74
    %p76 = scmp.ne.s32.totalorder %s68, %s70
    %p77 = scmp.eq.s32.totalorder %s18, 3
    %p78 = por %p76, %p77
    %p79 = scmp.ne.s32.totalorder %s70, %s71
    %p80 = scmp.eq.s32.totalorder %s18, 0
    %p81 = por %p79, %p80
    %p82 = scmp.ne.s32.totalorder %s70, %s71
    %p83 = scmp.eq.s32.totalorder %s19, 3
    %p84 = por %p82, %p83
    %p86 = scmp.ne.s32.totalorder %s71, %s85
    %p87 = scmp.eq.s32.totalorder %s19, 0
    %p88 = por %p86, %p87
    %s89 = ssub.s32 %s13, %s20
    %p90 = scmp.eq.s32.totalorder %s89, 0
    %s92 = sadd.s32 %s91, 1
    %s93 = scalar_select %p90, %s91, %s92
    %p96 = pneg %p90
    %p97 = scmp.eq.s32.totalorder %s13, 3
    %p98 = por %p96, %p97
    %p99 = scmp.ne.s32.totalorder %s91, %s94
    %p100 = scmp.eq.s32.totalorder %s13, 0
    %p101 = por %p99, %p100
    %p102 = scmp.ne.s32.totalorder %s91, %s94
    %p103 = scmp.eq.s32.totalorder %s18, 3
    %p104 = por %p102, %p103
    %p105 = scmp.ne.s32.totalorder %s94, %s95
    %p106 = scmp.eq.s32.totalorder %s18, 0
    %p107 = por %p105, %p106
    %p108 = scmp.ne.s32.totalorder %s94, %s95
    %p109 = scmp.eq.s32.totalorder %s19, 3
    %p110 = por %p108, %p109
    %p112 = scmp.ne.s32.totalorder %s95, %s111
    %p113 = scmp.eq.s32.totalorder %s19, 0
    %p114 = por %p112, %p113
    %s115 = ssub.s32 %s13, %s20
    %p116 = scmp.eq.s32.totalorder %s115, 0
    %s118 = sadd.s32 %s117, 1
    %s119 = scalar_select %p116, %s117, %s118
    %p122 = pneg %p116
    %p123 = scmp.eq.s32.totalorder %s13, 3
    %p124 = por %p122, %p123
    %p125 = scmp.ne.s32.totalorder %s117, %s120
    %p126 = scmp.eq.s32.totalorder %s13, 0
    %p127 = por %p125, %p126
    %p128 = scmp.ne.s32.totalorder %s117, %s120
    %p129 = scmp.eq.s32.totalorder %s18, 3
    %p130 = por %p128, %p129
    %p131 = scmp.ne.s32.totalorder %s120, %s121
    %p132 = scmp.eq.s32.totalorder %s18, 0
    %p133 = por %p131, %p132
    %p134 = scmp.ne.s32.totalorder %s120, %s121
    %p135 = scmp.eq.s32.totalorder %s19, 3
    %p136 = por %p134, %p135
    %p138 = scmp.ne.s32.totalorder %s121, %s137
    %p139 = scmp.eq.s32.totalorder %s19, 0
    %p140 = por %p138, %p139
    %s141 = ssub.s32 %s13, %s20
    %p142 = scmp.eq.s32.totalorder %s141, 0
    %s144 = sadd.s32 %s143, 1
    %s145 = scalar_select %p142, %s143, %s144
    %p148 = pneg %p142
    %p149 = scmp.eq.s32.totalorder %s13, 3
    %p150 = por %p148, %p149
    %p151 = scmp.ne.s32.totalorder %s143, %s146
    %p152 = scmp.eq.s32.totalorder %s13, 0
    %p153 = por %p151, %p152
    %p154 = scmp.ne.s32.totalorder %s143, %s146
    %p155 = scmp.eq.s32.totalorder %s18, 3
    %p156 = por %p154, %p155
    %p157 = scmp.ne.s32.totalorder %s146, %s147
    %p158 = scmp.eq.s32.totalorder %s18, 0
    %p159 = por %p157, %p158
    %p160 = scmp.ne.s32.totalorder %s146, %s147
    %p161 = scmp.eq.s32.totalorder %s19, 3
    %p162 = por %p160, %p161
    %p164 = scmp.ne.s32.totalorder %s147, %s163
    %p165 = scmp.eq.s32.totalorder %s19, 0
    %p166 = por %p164, %p165
    %s167 = ssub.s32 %s13, %s20
    %p168 = scmp.eq.s32.totalorder %s167, 0
    %s170 = sadd.s32 %s169, 1
    %s171 = scalar_select %p168, %s169, %s170
    %p174 = pneg %p168
    %p175 = scmp.eq.s32.totalorder %s13, 3
    %p176 = por %p174, %p175
    %p177 = scmp.ne.s32.totalorder %s169, %s172
    %p178 = scmp.eq.s32.totalorder %s13, 0
    %p179 = por %p177, %p178
    %p180 = scmp.ne.s32.totalorder %s169, %s172
    %p181 = scmp.eq.s32.totalorder %s18, 3
    %p182 = por %p180, %p181
    %p183 = scmp.ne.s32.totalorder %s172, %s173
    %p184 = scmp.eq.s32.totalorder %s18, 0
    %p185 = por %p183, %p184
    %p186 = scmp.ne.s32.totalorder %s172, %s173
    %p187 = scmp.eq.s32.totalorder %s19, 3
    %p188 = por %p186, %p187
    %p190 = scmp.ne.s32.totalorder %s173, %s189
    %p191 = scmp.eq.s32.totalorder %s19, 0
    %p192 = por %p190, %p191
    %p193 = scmp.le.s32.totalorder 1, %s13
    %p194 = scmp.lt.s32.totalorder %s13, 5
    %p195 = pnand %p193, %p194
    %p196 = pneg %p195
    // Predicated region
    $region9: #{dnn_forward.1} parent=5 // pred_check
      _
    $region10: #{dnn_forward.1} parent=5 // pred_check_branch
      %198 = sbr.rel (%p195) target = $region12
    $region11: #{dnn_forward.1} parent=5 // pred_region
      %s199 = ssub.s32 %s13, 1
      // Predicated region
      $region13: #{dnn_forward.1} parent=11 // pred_check
        %p200 = pneg %p60
      $region14: #{dnn_forward.1} parent=11 // pred_check_branch
        %202 = sbr.rel (%p200) target = $region16
      $region15: #{dnn_forward.1} parent=11 // pred_region
        _
      $region16: #{dnn_forward.1} parent=11 // pred_fallthru
        _
      // Predicated region
      $region17: #{dnn_forward.1} parent=11 // pred_check
        %p203 = pneg %p81
      $region18: #{dnn_forward.1} parent=11 // pred_check_branch
        %205 = sbr.rel (%p203) target = $region20
      $region19: #{dnn_forward.1} parent=11 // pred_region
        _
      $region20: #{dnn_forward.1} parent=11 // pred_fallthru
        _
    $region12: #{dnn_forward.1} parent=5 // pred_fallthru
      _
    %p206 = scmp.lt.s32.totalorder %s13, 4
    // Predicated region
    $region21: #{dnn_forward.1} parent=5 // pred_check
      %p207 = pneg %p206
    $region22: #{dnn_forward.1} parent=5 // pred_check_branch
      %209 = sbr.rel (%p207) target = $region24
    $region23: #{dnn_forward.1} parent=5 // pred_region
      // Predicated region
      $region25: #{dnn_forward.1} parent=23 // pred_check
        %p210 = pneg %p33
      $region26: #{dnn_forward.1} parent=23 // pred_check_branch
        %212 = sbr.rel (%p210) target = $region28
      $region27: #{dnn_forward.1} parent=23 // pred_region
        %s213 = smul.u32 32, %s13
        %p214 = scmp.lt.s32.totalorder %s213, 127
        %s215 = scalar_select %p214, %s213, 127
        %s216 = smul.addr %s215, 4
        %s217 = scalar_lea.vmem %s0, %s216
        %s218 = smul.u32 32, %s13
      $region28: #{dnn_forward.1} parent=23 // pred_fallthru
        _
      // Predicated region
      $region29: #{dnn_forward.1} parent=23 // pred_check
        %p219 = pneg %p101
      $region30: #{dnn_forward.1} parent=23 // pred_check_branch
        %221 = sbr.rel (%p219) target = $region32
      $region31: #{dnn_forward.1} parent=23 // pred_region
        %s222 = smul.u32 32, %s13
        %p223 = scmp.lt.s32.totalorder %s222, 127
        %s224 = scalar_select %p223, %s222, 127
        %s225 = smul.addr %s224, 8
        %s226 = scalar_lea.vmem %s3, %s225
        %s227 = smul.u32 32, %s13
      $region32: #{dnn_forward.1} parent=23 // pred_fallthru
        _
    $region24: #{dnn_forward.1} parent=5 // pred_fallthru
      _
    %p228 = scmp.le.s32.totalorder 1, %s13
    %p229 = scmp.lt.s32.totalorder %s13, 5
    %p230 = pnand %p228, %p229
    %p231 = pneg %p230
    // Predicated region
    $region33: #{dnn_forward.1} parent=5 // pred_check
      _
    $region34: #{dnn_forward.1} parent=5 // pred_check_branch
      %233 = sbr.rel (%p230) target = $region36
    $region35: #{dnn_forward.1} parent=5 // pred_region
      %s234 = ssub.s32 %s13, 1
      %s235 = smul.u32 32, %s18
      %p236 = scmp.lt.s32.totalorder %s235, 127
      %s237 = scalar_select %p236, %s235, 127
      %s238 = smul.addr %s237, 4
      %s239 = scalar_lea.vmem %s0, %s238
      %p240 = pneg %p39
      %p241 = pneg %p36
      %p242 = pneg %p60
      %p243 = pneg %p57
      %p244 = pneg %p81
      %p245 = pneg %p78
      %s246 = smul.u32 32, %s18
      %p247 = scmp.lt.s32.totalorder %s246, 127
      %s248 = scalar_select %p247, %s246, 127
      %s249 = smul.addr %s248, 8
      %s250 = scalar_lea.vmem %s3, %s249
      %p251 = pneg %p107
      %p252 = pneg %p104
      %p253 = pneg %p133
      %p254 = pneg %p130
      %s255 = smul.u32 32, %s18
      %p256 = scmp.lt.s32.totalorder %s255, 127
      %s257 = scalar_select %p256, %s255, 127
      %s258 = smul.addr %s257, 8
      %s259 = scalar_lea.vmem %s4, %s258
      %p260 = pneg %p159
      %p261 = pneg %p156
      %s262 = smul.u32 32, %s18
      %p263 = scmp.lt.s32.totalorder %s262, 127
      %s264 = scalar_select %p263, %s262, 127
      %s265 = smul.addr %s264, 8
      %s266 = scalar_lea.vmem %s5, %s265
      %p267 = pneg %p185
      %p268 = pneg %p182
      %s269 = smul.u32 32, %s18
      %p270 = scmp.lt.s32.totalorder %s269, 127
      %s271 = scalar_select %p270, %s269, 127
      %s272 = smul.addr %s271, 8
      %s273 = scalar_lea.vmem %s6, %s272
      %s274 = smul.u32 32, %s18
      %p275 = scmp.lt.s32.totalorder %s274, 127
      %s276 = scalar_select %p275, %s274, 127
      %s277 = smul.addr %s276, 4
      %s278 = scalar_lea.vmem %s0, %s277
      %s279 = smul.u32 32, %s18
      %s280 = smul.u32 32, %s18
      %p281 = scmp.lt.s32.totalorder %s280, 127
      %s282 = scalar_select %p281, %s280, 127
      %s283 = smul.addr %s282, 8
      %s284 = scalar_lea.vmem %s3, %s283
      %s285 = smul.u32 32, %s18
      %s286 = smul.u32 32, %s18
      %p287 = scmp.lt.s32.totalorder %s286, 127
      %s288 = scalar_select %p287, %s286, 127
      %s289 = smul.addr %s288, 8
      %s290 = scalar_lea.vmem %s4, %s289
      %s291 = smul.u32 32, %s18
      %s292 = smul.u32 32, %s18
      %p293 = scmp.lt.s32.totalorder %s292, 127
      %s294 = scalar_select %p293, %s292, 127
      %s295 = smul.addr %s294, 8
      %s296 = scalar_lea.vmem %s5, %s295
      %s297 = smul.u32 32, %s18
      %s298 = smul.u32 32, %s18
      %p299 = scmp.lt.s32.totalorder %s298, 127
      %s300 = scalar_select %p299, %s298, 127
      %s301 = smul.addr %s300, 8
      %s302 = scalar_lea.vmem %s6, %s301
      %s303 = smul.u32 32, %s18
      %v305 = vld [vmem:[%s278] sm:$0xf]
      %v306 = vld [vmem:[%s278 + $0x4] sm:$0xf]
      %v307 = vld [vmem:[%s278 + $0x8] sm:$0xf]
      %v308 = vld [vmem:[%s278 + $0xc] sm:$0xf]
      %v309 = vld [vmem:[%s278 + $0x10] sm:$0xf]
      %v310 = vld [vmem:[%s278 + $0x14] sm:$0xf]
      %v311 = vld [vmem:[%s278 + $0x18] sm:$0xf]
      %v312 = vld [vmem:[%s278 + $0x1c] sm:$0xf]
      %v313 = vld [vmem:[%s278 + $0x20] sm:$0xf]
      %v314 = vld [vmem:[%s278 + $0x24] sm:$0xf]
      %v315 = vld [vmem:[%s278 + $0x28] sm:$0xf]
      %v316 = vld [vmem:[%s278 + $0x2c] sm:$0xf]
      %v317 = vld [vmem:[%s278 + $0x30] sm:$0xf]
      %v318 = vld [vmem:[%s278 + $0x34] sm:$0xf]
      %v319 = vld [vmem:[%s278 + $0x38] sm:$0xf]
      %v320 = vld [vmem:[%s278 + $0x3c] sm:$0xf]
      %v321 = vld [vmem:[%s278 + $0x40] sm:$0xf]
      %v322 = vld [vmem:[%s278 + $0x44] sm:$0xf]
      %v323 = vld [vmem:[%s278 + $0x48] sm:$0xf]
      %v324 = vld [vmem:[%s278 + $0x4c] sm:$0xf]
      %v325 = vld [vmem:[%s278 + $0x50] sm:$0xf]
      %v326 = vld [vmem:[%s278 + $0x54] sm:$0xf]
      %v327 = vld [vmem:[%s278 + $0x58] sm:$0xf]
      %v328 = vld [vmem:[%s278 + $0x5c] sm:$0xf]
      %v329 = vld [vmem:[%s278 + $0x60] sm:$0xf]
      %v330 = vld [vmem:[%s278 + $0x64] sm:$0xf]
      %v331 = vld [vmem:[%s278 + $0x68] sm:$0xf]
      %v332 = vld [vmem:[%s278 + $0x6c] sm:$0xf]
      %v333 = vld [vmem:[%s278 + $0x70] sm:$0xf]
      %v334 = vld [vmem:[%s278 + $0x74] sm:$0xf]
      %v335 = vld [vmem:[%s278 + $0x78] sm:$0xf]
      %v336 = vld [vmem:[%s278 + $0x7c] sm:$0xf]
      %v337 = vld [vmem:[%s1] sm:$0xf]
      %v338 = vld [vmem:[%s1 + $0x4] sm:$0xf]
      %v339 = vld [vmem:[%s1 + $0x8] sm:$0xf]
      %v340 = vld [vmem:[%s1 + $0xc] sm:$0xf]
      %v341 = vld [vmem:[%s1 + $0x10] sm:$0xf]
      %v342 = vld [vmem:[%s1 + $0x14] sm:$0xf]
      %v343 = vld [vmem:[%s1 + $0x18] sm:$0xf]
      %v344 = vld [vmem:[%s1 + $0x1c] sm:$0xf]
      %v345 = vld [vmem:[%s1 + $0x20] sm:$0xf]
      %v346 = vld [vmem:[%s1 + $0x24] sm:$0xf]
      %v347 = vld [vmem:[%s1 + $0x28] sm:$0xf]
      %v348 = vld [vmem:[%s1 + $0x2c] sm:$0xf]
      %v349 = vld [vmem:[%s1 + $0x30] sm:$0xf]
      %v350 = vld [vmem:[%s1 + $0x34] sm:$0xf]
      %v351 = vld [vmem:[%s1 + $0x38] sm:$0xf]
      %v352 = vld [vmem:[%s1 + $0x3c] sm:$0xf]
      %v353 = vld [vmem:[%s1 + $0x40] sm:$0xf]
      %v354 = vld [vmem:[%s1 + $0x44] sm:$0xf]
      %v355 = vld [vmem:[%s1 + $0x48] sm:$0xf]
      %v356 = vld [vmem:[%s1 + $0x4c] sm:$0xf]
      %v357 = vld [vmem:[%s1 + $0x50] sm:$0xf]
      %v358 = vld [vmem:[%s1 + $0x54] sm:$0xf]
      %v359 = vld [vmem:[%s1 + $0x58] sm:$0xf]
      %v360 = vld [vmem:[%s1 + $0x5c] sm:$0xf]
      %v361 = vld [vmem:[%s1 + $0x60] sm:$0xf]
      %v362 = vld [vmem:[%s1 + $0x64] sm:$0xf]
      %v363 = vld [vmem:[%s1 + $0x68] sm:$0xf]
      %v364 = vld [vmem:[%s1 + $0x6c] sm:$0xf]
      %v365 = vld [vmem:[%s1 + $0x70] sm:$0xf]
      %v366 = vld [vmem:[%s1 + $0x74] sm:$0xf]
      %v367 = vld [vmem:[%s1 + $0x78] sm:$0xf]
      %v368 = vld [vmem:[%s1 + $0x7c] sm:$0xf]
      %v369 = vld [vmem:[%s1 + $0x80] sm:$0xf]
      %v370 = vld [vmem:[%s1 + $0x84] sm:$0xf]
      %v371 = vld [vmem:[%s1 + $0x88] sm:$0xf]
      %v372 = vld [vmem:[%s1 + $0x8c] sm:$0xf]
      %v373 = vld [vmem:[%s2] sm:$0x1]
      %v374 = vld [vmem:[%s2 + $0x1] sm:$0x1]
      %v375 = vld [vmem:[%s2 + $0x2] sm:$0x1]
      %v376 = vlaneseq
      %v377 = vshrl.u32 %v376, 7
      %v378 = vsub.s32 0, %v377
      %v379 = vrot.slane %v373, %v378
      %v412 = vunpack.c.l.b16 %v305
      %v413 = vunpack.c.l.b16 %v306
      %v414 = vunpack.c.l.b16 %v307
      %v415 = vunpack.c.l.b16 %v308
      %v416 = vunpack.c.l.b16 %v309
      %v417 = vunpack.c.l.b16 %v310
      %v418 = vunpack.c.l.b16 %v311
      %v419 = vunpack.c.l.b16 %v312
      %v420 = vunpack.c.l.b16 %v313
      %v421 = vunpack.c.l.b16 %v314
      %v422 = vunpack.c.l.b16 %v315
      %v423 = vunpack.c.l.b16 %v316
      %v424 = vunpack.c.l.b16 %v317
      %v425 = vunpack.c.l.b16 %v318
      %v426 = vunpack.c.l.b16 %v319
      %v427 = vunpack.c.l.b16 %v320
      %v428 = vunpack.c.l.b16 %v321
      %v429 = vunpack.c.l.b16 %v322
      %v430 = vunpack.c.l.b16 %v323
      %v431 = vunpack.c.l.b16 %v324
      %v432 = vunpack.c.l.b16 %v325
      %v433 = vunpack.c.l.b16 %v326
      %v434 = vunpack.c.l.b16 %v327
      %v435 = vunpack.c.l.b16 %v328
      %v436 = vunpack.c.l.b16 %v329
      %v437 = vunpack.c.l.b16 %v330
      %v438 = vunpack.c.l.b16 %v331
      %v439 = vunpack.c.l.b16 %v332
      %v440 = vunpack.c.l.b16 %v333
      %v441 = vunpack.c.l.b16 %v334
      %v442 = vunpack.c.l.b16 %v335
      %v443 = vunpack.c.l.b16 %v336
      %v444 = vpack.c.b16 %v413, %v412
      %v445 = vpack.c.b16 %v415, %v414
      %v446 = vpack.c.b16 %v417, %v416
      %v447 = vpack.c.b16 %v419, %v418
      %v448 = vpack.c.b16 %v421, %v420
      %v449 = vpack.c.b16 %v423, %v422
      %v450 = vpack.c.b16 %v425, %v424
      %v451 = vpack.c.b16 %v427, %v426
      %v452 = vpack.c.b16 %v429, %v428
      %v453 = vpack.c.b16 %v431, %v430
      %v454 = vpack.c.b16 %v433, %v432
      %v455 = vpack.c.b16 %v435, %v434
      %v456 = vpack.c.b16 %v437, %v436
      %v457 = vpack.c.b16 %v439, %v438
      %v458 = vpack.c.b16 %v441, %v440
      %v459 = vpack.c.b16 %v443, %v442
      %v464 = vunpack.c.l.b16 %v337
      %v465 = vunpack.c.l.b16 %v338
      %v466 = vunpack.c.l.b16 %v339
      %v467 = vunpack.c.l.b16 %v340
      %v468 = vpack.c.b16 %v465, %v464
      %v469 = vpack.c.b16 %v467, %v466
      %vm472 = vcmask 261120
      %v474 = vsel %vm472, %v444, 0
      %v477 = vsel %vm472, %v445, 0
      %v480 = vsel %vm472, %v446, 0
      %v483 = vsel %vm472, %v447, 0
      %v486 = vsel %vm472, %v448, 0
      %v489 = vsel %vm472, %v449, 0
      %v492 = vsel %vm472, %v450, 0
      %v495 = vsel %vm472, %v451, 0
      %v498 = vsel %vm472, %v452, 0
      %v501 = vsel %vm472, %v453, 0
      %v504 = vsel %vm472, %v454, 0
      %v507 = vsel %vm472, %v455, 0
      %v510 = vsel %vm472, %v456, 0
      %v513 = vsel %vm472, %v457, 0
      %v516 = vsel %vm472, %v458, 0
      %v519 = vsel %vm472, %v459, 0
      %521 = vmatprep.subr.bf16.mxu0 0
      %522 = vmatpush1.bf16.msra.mxu0 %v468
      %523 = vmatprep.subr.bf16.mxu0 0
      %524 = vmatpush1.bf16.msra.mxu0 %v469
      %525 = vmatprep.subr.bf16.mxu0 0
      %526 = vmatpush1.bf16.msra.mxu0 0
      %527 = vmatprep.subr.bf16.mxu0 0
      %528 = vmatpush1.bf16.msra.mxu0 0
      %529 = vmatprep.subr.bf16.mxu0 0
      %530 = vmatpush1.bf16.msra.mxu0 0
      %531 = vmatprep.subr.bf16.mxu0 0
      %532 = vmatpush1.bf16.msra.mxu0 0
      %533 = vmatprep.subr.bf16.mxu0 0
      %534 = vmatpush1.bf16.msra.mxu0 0
      %535 = vmatprep.subr.bf16.mxu0 0
      %536 = vmatpush1.bf16.msra.mxu0 0
      %537 = vmatprep.subr.bf16.mxu0 0
      %538 = vmatpush1.bf16.msra.mxu0 0
      %539 = vmatprep.subr.bf16.mxu0 0
      %540 = vmatpush1.bf16.msra.mxu0 0
      %541 = vmatprep.subr.bf16.mxu0 0
      %542 = vmatpush1.bf16.msra.mxu0 0
      %543 = vmatprep.subr.bf16.mxu0 0
      %544 = vmatpush1.bf16.msra.mxu0 0
      %545 = vmatprep.subr.bf16.mxu0 0
      %546 = vmatpush1.bf16.msra.mxu0 0
      %547 = vmatprep.subr.bf16.mxu0 0
      %548 = vmatpush1.bf16.msra.mxu0 0
      %549 = vmatprep.subr.bf16.mxu0 0
      %550 = vmatpush1.bf16.msra.mxu0 0
      %551 = vmatprep.subr.bf16.mxu0 0
      %552 = vmatpush1.bf16.msra.mxu0 0
      %553 = vmatprep.mubr.bf16.mxu0 0
      %554 = vmatmul.mubr.bf16.gmra.mrb[0].mxu0 %v474
      %v555 = vpop.f32.mrb[0].mxu0
      %v556 = vadd.f32 %v379, %v555
      %v557 = vpop.f32.mrb[0].mxu0
      %v558 = vpop.f32.mrb[0].mxu0
      %v559 = vadd.f32 %v379, %v558
      %v560 = vpop.f32.mrb[0].mxu0
      %561 = vmatprep.mubr.bf16.mxu0 0
      %562 = vmatmul.mubr.bf16.gmra.mrb[0].mxu0 %v477
      %v563 = vpop.f32.mrb[0].mxu0
      %v564 = vadd.f32 %v379, %v563
      %v565 = vpop.f32.mrb[0].mxu0
      %v566 = vpop.f32.mrb[0].mxu0
      %v567 = vadd.f32 %v379, %v566
      %v568 = vpop.f32.mrb[0].mxu0
      %569 = vmatprep.mubr.bf16.mxu0 0
      %570 = vmatmul.mubr.bf16.gmra.mrb[0].mxu0 %v480
      %v571 = vpop.f32.mrb[0].mxu0
      %v572 = vadd.f32 %v379, %v571
      %v573 = vpop.f32.mrb[0].mxu0
      %v574 = vpop.f32.mrb[0].mxu0
      %v575 = vadd.f32 %v379, %v574
      %v576 = vpop.f32.mrb[0].mxu0
      %577 = vmatprep.mubr.bf16.mxu0 0
      %578 = vmatmul.mubr.bf16.gmra.mrb[0].mxu0 %v483
      %v579 = vpop.f32.mrb[0].mxu0
      %v580 = vadd.f32 %v379, %v579
      %v581 = vpop.f32.mrb[0].mxu0
      %v582 = vpop.f32.mrb[0].mxu0
      %v583 = vadd.f32 %v379, %v582
      %v584 = vpop.f32.mrb[0].mxu0
      %585 = vmatprep.mubr.bf16.mxu0 0
      %586 = vmatmul.mubr.bf16.gmra.mrb[0].mxu0 %v486
      %v587 = vpop.f32.mrb[0].mxu0
      %v588 = vadd.f32 %v379, %v587
      %v589 = vpop.f32.mrb[0].mxu0
      %v590 = vpop.f32.mrb[0].mxu0
      %v591 = vadd.f32 %v379, %v590
      %v592 = vpop.f32.mrb[0].mxu0
      %593 = vmatprep.mubr.bf16.mxu0 0
      %594 = vmatmul.mubr.bf16.gmra.mrb[0].mxu0 %v489
      %v595 = vpop.f32.mrb[0].mxu0
      %v596 = vadd.f32 %v379, %v595
      %v597 = vpop.f32.mrb[0].mxu0
      %v598 = vpop.f32.mrb[0].mxu0
      %v599 = vadd.f32 %v379, %v598
      %v600 = vpop.f32.mrb[0].mxu0
      %601 = vmatprep.mubr.bf16.mxu0 0
      %602 = vmatmul.mubr.bf16.gmra.mrb[0].mxu0 %v492
      %v603 = vpop.f32.mrb[0].mxu0
      %v604 = vadd.f32 %v379, %v603
      %v605 = vpop.f32.mrb[0].mxu0
      %v606 = vpop.f32.mrb[0].mxu0
      %v607 = vadd.f32 %v379, %v606
      %v608 = vpop.f32.mrb[0].mxu0
      %609 = vmatprep.mubr.bf16.mxu0 0
      %610 = vmatmul.mubr.bf16.gmra.mrb[0].mxu0 %v495
      %v611 = vpop.f32.mrb[0].mxu0
      %v612 = vadd.f32 %v379, %v611
      %v613 = vpop.f32.mrb[0].mxu0
      %v614 = vpop.f32.mrb[0].mxu0
      %v615 = vadd.f32 %v379, %v614
      %v616 = vpop.f32.mrb[0].mxu0
      %617 = vmatprep.mubr.bf16.mxu0 0
      %618 = vmatmul.mubr.bf16.gmra.mrb[0].mxu0 %v498
      %v619 = vpop.f32.mrb[0].mxu0
      %v620 = vadd.f32 %v379, %v619
      %v621 = vpop.f32.mrb[0].mxu0
      %v622 = vpop.f32.mrb[0].mxu0
      %v623 = vadd.f32 %v379, %v622
      %v624 = vpop.f32.mrb[0].mxu0
      %625 = vmatprep.mubr.bf16.mxu0 0
      %626 = vmatmul.mubr.bf16.gmra.mrb[0].mxu0 %v501
      %v627 = vpop.f32.mrb[0].mxu0
      %v628 = vadd.f32 %v379, %v627
      %v629 = vpop.f32.mrb[0].mxu0
      %v630 = vpop.f32.mrb[0].mxu0
      %v631 = vadd.f32 %v379, %v630
      %v632 = vpop.f32.mrb[0].mxu0
      %633 = vmatprep.mubr.bf16.mxu0 0
      %634 = vmatmul.mubr.bf16.gmra.mrb[0].mxu0 %v504
      %v635 = vpop.f32.mrb[0].mxu0
      %v636 = vadd.f32 %v379, %v635
      %v637 = vpop.f32.mrb[0].mxu0
      %v638 = vpop.f32.mrb[0].mxu0
      %v639 = vadd.f32 %v379, %v638
      %v640 = vpop.f32.mrb[0].mxu0
      %641 = vmatprep.mubr.bf16.mxu0 0
      %642 = vmatmul.mubr.bf16.gmra.mrb[0].mxu0 %v507
      %v643 = vpop.f32.mrb[0].mxu0
      %v644 = vadd.f32 %v379, %v643
      %v645 = vpop.f32.mrb[0].mxu0
      %v646 = vpop.f32.mrb[0].mxu0
      %v647 = vadd.f32 %v379, %v646
      %v648 = vpop.f32.mrb[0].mxu0
      %649 = vmatprep.mubr.bf16.mxu0 0
      %650 = vmatmul.mubr.bf16.gmra.mrb[0].mxu0 %v510
      %v651 = vpop.f32.mrb[0].mxu0
      %v652 = vadd.f32 %v379, %v651
      %v653 = vpop.f32.mrb[0].mxu0
      %v654 = vpop.f32.mrb[0].mxu0
      %v655 = vadd.f32 %v379, %v654
      %v656 = vpop.f32.mrb[0].mxu0
      %657 = vmatprep.mubr.bf16.mxu0 0
      %658 = vmatmul.mubr.bf16.gmra.mrb[0].mxu0 %v513
      %v659 = vpop.f32.mrb[0].mxu0
      %v660 = vadd.f32 %v379, %v659
      %v661 = vpop.f32.mrb[0].mxu0
      %v662 = vpop.f32.mrb[0].mxu0
      %v663 = vadd.f32 %v379, %v662
      %v664 = vpop.f32.mrb[0].mxu0
      %665 = vmatprep.mubr.bf16.mxu0 0
      %666 = vmatmul.mubr.bf16.gmra.mrb[0].mxu0 %v516
      %v667 = vpop.f32.mrb[0].mxu0
      %v668 = vadd.f32 %v379, %v667
      %v669 = vpop.f32.mrb[0].mxu0
      %v670 = vpop.f32.mrb[0].mxu0
      %v671 = vadd.f32 %v379, %v670
      %v672 = vpop.f32.mrb[0].mxu0
      %673 = vmatprep.mubr.bf16.mxu0 0
      %674 = vmatmul.mubr.bf16.gmra.mrb[0].mxu0 %v519
      %v675 = vpop.f32.mrb[0].mxu0
      %v676 = vadd.f32 %v379, %v675
      %v677 = vpop.f32.mrb[0].mxu0
      %v678 = vpop.f32.mrb[0].mxu0
      %v679 = vadd.f32 %v379, %v678
      %v680 = vpop.f32.mrb[0].mxu0
      %681 = vdwg.mxu0
      %v682 = vtanh.pop %v556
      %v683 = vtanh.pop %v559
      %v684 = vtanh.pop %v564
      %v685 = vtanh.pop %v567
      %v686 = vtanh.pop %v572
      %v687 = vtanh.pop %v575
      %v688 = vtanh.pop %v580
      %v689 = vtanh.pop %v583
      %v690 = vtanh.pop %v588
      %v691 = vtanh.pop %v591
      %v692 = vtanh.pop %v596
      %v693 = vtanh.pop %v599
      %v694 = vtanh.pop %v604
      %v695 = vtanh.pop %v607
      %v696 = vtanh.pop %v612
      %v697 = vtanh.pop %v615
      %v698 = vtanh.pop %v620
      %v699 = vtanh.pop %v623
      %v700 = vtanh.pop %v628
      %v701 = vtanh.pop %v631
      %v702 = vtanh.pop %v636
      %v703 = vtanh.pop %v639
      %v704 = vtanh.pop %v644
      %v705 = vtanh.pop %v647
      %v706 = vtanh.pop %v652
      %v707 = vtanh.pop %v655
      %v708 = vtanh.pop %v660
      %v709 = vtanh.pop %v663
      %v710 = vtanh.pop %v668
      %v711 = vtanh.pop %v671
      %v712 = vtanh.pop %v676
      %v713 = vtanh.pop %v679
      %v714 = vpack.c.bf16 %v683, %v682
      %v715 = vpack.c.bf16 %v685, %v684
      %v716 = vpack.c.bf16 %v687, %v686
      %v717 = vpack.c.bf16 %v689, %v688
      %v718 = vpack.c.bf16 %v691, %v690
      %v719 = vpack.c.bf16 %v693, %v692
      %v720 = vpack.c.bf16 %v695, %v694
      %v721 = vpack.c.bf16 %v697, %v696
      %v722 = vpack.c.bf16 %v699, %v698
      %v723 = vpack.c.bf16 %v701, %v700
      %v724 = vpack.c.bf16 %v703, %v702
      %v725 = vpack.c.bf16 %v705, %v704
      %v726 = vpack.c.bf16 %v707, %v706
      %v727 = vpack.c.bf16 %v709, %v708
      %v728 = vpack.c.bf16 %v711, %v710
      %v729 = vpack.c.bf16 %v713, %v712
      %v730 = vlaneseq
      %v731 = vshrl.u32 %v730, 7
      %v732 = vsub.s32 0, %v731
      %v733 = vrot.slane %v374, %v732
      %v750 = vunpack.c.l.b16 %v341
      %v751 = vunpack.c.l.b16 %v342
      %v752 = vunpack.c.l.b16 %v343
      %v753 = vunpack.c.l.b16 %v344
      %v754 = vunpack.c.l.b16 %v345
      %v755 = vunpack.c.l.b16 %v346
      %v756 = vunpack.c.l.b16 %v347
      %v757 = vunpack.c.l.b16 %v348
      %v758 = vunpack.c.l.b16 %v349
      %v759 = vunpack.c.l.b16 %v350
      %v760 = vunpack.c.l.b16 %v351
      %v761 = vunpack.c.l.b16 %v352
      %v762 = vunpack.c.l.b16 %v353
      %v763 = vunpack.c.l.b16 %v354
      %v764 = vunpack.c.l.b16 %v355
      %v765 = vunpack.c.l.b16 %v356
      %v766 = vpack.c.b16 %v751, %v750
      %v767 = vpack.c.b16 %v753, %v752
      %v768 = vpack.c.b16 %v755, %v754
      %v769 = vpack.c.b16 %v757, %v756
      %v770 = vpack.c.b16 %v759, %v758
      %v771 = vpack.c.b16 %v761, %v760
      %v772 = vpack.c.b16 %v763, %v762
      %v773 = vpack.c.b16 %v765, %v764
      %782 = vmatprep.subr.bf16.mxu0 0
      %783 = vmatpush1.bf16.msra.mxu0 %v766
      %784 = vmatprep.subr.bf16.mxu0 0
      %785 = vmatpush1.bf16.msra.mxu0 %v767
      %786 = vmatprep.subr.bf16.mxu0 0
      %787 = vmatpush1.bf16.msra.mxu0 %v768
      %788 = vmatprep.subr.bf16.mxu0 0
      %789 = vmatpush1.bf16.msra.mxu0 %v769
      %790 = vmatprep.subr.bf16.mxu0 0
      %791 = vmatpush1.bf16.msra.mxu0 %v770
      %792 = vmatprep.subr.bf16.mxu0 0
      %793 = vmatpush1.bf16.msra.mxu0 %v771
      %794 = vmatprep.subr.bf16.mxu0 0
      %795 = vmatpush1.bf16.msra.mxu0 %v772
      %796 = vmatprep.subr.bf16.mxu0 0
      %797 = vmatpush1.bf16.msra.mxu0 %v773
      %798 = vmatprep.subr.bf16.mxu0 0
      %799 = vmatpush1.bf16.msra.mxu0 0
      %800 = vmatprep.subr.bf16.mxu0 0
      %801 = vmatpush1.bf16.msra.mxu0 0
      %802 = vmatprep.subr.bf16.mxu0 0
      %803 = vmatpush1.bf16.msra.mxu0 0
      %804 = vmatprep.subr.bf16.mxu0 0
      %805 = vmatpush1.bf16.msra.mxu0 0
      %806 = vmatprep.subr.bf16.mxu0 0
      %807 = vmatpush1.bf16.msra.mxu0 0
      %808 = vmatprep.subr.bf16.mxu0 0
      %809 = vmatpush1.bf16.msra.mxu0 0
      %810 = vmatprep.subr.bf16.mxu0 0
      %811 = vmatpush1.bf16.msra.mxu0 0
      %812 = vmatprep.subr.bf16.mxu0 0
      %813 = vmatpush1.bf16.msra.mxu0 0
      %814 = vmatprep.mubr.bf16.mxu0 0
      %815 = vmatmul.mubr.bf16.gmra.mrb[0].mxu0 %v714
      %v816 = vpop.f32.mrb[0].mxu0
      %v817 = vadd.f32 %v733, %v816
      %v818 = vpop.f32.mrb[0].mxu0
      %v819 = vpop.f32.mrb[0].mxu0
      %v820 = vadd.f32 %v733, %v819
      %v821 = vpop.f32.mrb[0].mxu0
      %822 = vmatprep.mubr.bf16.mxu0 0
      %823 = vmatmul.mubr.bf16.gmra.mrb[0].mxu0 %v715
      %v824 = vpop.f32.mrb[0].mxu0
      %v825 = vadd.f32 %v733, %v824
      %v826 = vpop.f32.mrb[0].mxu0
      %v827 = vpop.f32.mrb[0].mxu0
      %v828 = vadd.f32 %v733, %v827
      %v829 = vpop.f32.mrb[0].mxu0
      %830 = vmatprep.mubr.bf16.mxu0 0
      %831 = vmatmul.mubr.bf16.gmra.mrb[0].mxu0 %v716
      %v832 = vpop.f32.mrb[0].mxu0
      %v833 = vadd.f32 %v733, %v832
      %v834 = vpop.f32.mrb[0].mxu0
      %v835 = vpop.f32.mrb[0].mxu0
      %v836 = vadd.f32 %v733, %v835
      %v837 = vpop.f32.mrb[0].mxu0
      %838 = vmatprep.mubr.bf16.mxu0 0
      %839 = vmatmul.mubr.bf16.gmra.mrb[0].mxu0 %v717
      %v840 = vpop.f32.mrb[0].mxu0
      %v841 = vadd.f32 %v733, %v840
      %v842 = vpop.f32.mrb[0].mxu0
      %v843 = vpop.f32.mrb[0].mxu0
      %v844 = vadd.f32 %v733, %v843
      %v845 = vpop.f32.mrb[0].mxu0
      %846 = vmatprep.mubr.bf16.mxu0 0
      %847 = vmatmul.mubr.bf16.gmra.mrb[0].mxu0 %v718
      %v848 = vpop.f32.mrb[0].mxu0
      %v849 = vadd.f32 %v733, %v848
      %v850 = vpop.f32.mrb[0].mxu0
      %v851 = vpop.f32.mrb[0].mxu0
      %v852 = vadd.f32 %v733, %v851
      %v853 = vpop.f32.mrb[0].mxu0
      %854 = vmatprep.mubr.bf16.mxu0 0
      %855 = vmatmul.mubr.bf16.gmra.mrb[0].mxu0 %v719
      %v856 = vpop.f32.mrb[0].mxu0
      %v857 = vadd.f32 %v733, %v856
      %v858 = vpop.f32.mrb[0].mxu0
      %v859 = vpop.f32.mrb[0].mxu0
      %v860 = vadd.f32 %v733, %v859
      %v861 = vpop.f32.mrb[0].mxu0
      %862 = vmatprep.mubr.bf16.mxu0 0
      %863 = vmatmul.mubr.bf16.gmra.mrb[0].mxu0 %v720
      %v864 = vpop.f32.mrb[0].mxu0
      %v865 = vadd.f32 %v733, %v864
      %v866 = vpop.f32.mrb[0].mxu0
      %v867 = vpop.f32.mrb[0].mxu0
      %v868 = vadd.f32 %v733, %v867
      %v869 = vpop.f32.mrb[0].mxu0
      %870 = vmatprep.mubr.bf16.mxu0 0
      %871 = vmatmul.mubr.bf16.gmra.mrb[0].mxu0 %v721
      %v872 = vpop.f32.mrb[0].mxu0
      %v873 = vadd.f32 %v733, %v872
      %v874 = vpop.f32.mrb[0].mxu0
      %v875 = vpop.f32.mrb[0].mxu0
      %v876 = vadd.f32 %v733, %v875
      %v877 = vpop.f32.mrb[0].mxu0
      %878 = vmatprep.mubr.bf16.mxu0 0
      %879 = vmatmul.mubr.bf16.gmra.mrb[0].mxu0 %v722
      %v880 = vpop.f32.mrb[0].mxu0
      %v881 = vadd.f32 %v733, %v880
      %v882 = vpop.f32.mrb[0].mxu0
      %v883 = vpop.f32.mrb[0].mxu0
      %v884 = vadd.f32 %v733, %v883
      %v885 = vpop.f32.mrb[0].mxu0
      %886 = vmatprep.mubr.bf16.mxu0 0
      %887 = vmatmul.mubr.bf16.gmra.mrb[0].mxu0 %v723
      %v888 = vpop.f32.mrb[0].mxu0
      %v889 = vadd.f32 %v733, %v888
      %v890 = vpop.f32.mrb[0].mxu0
      %v891 = vpop.f32.mrb[0].mxu0
      %v892 = vadd.f32 %v733, %v891
      %v893 = vpop.f32.mrb[0].mxu0
      %894 = vmatprep.mubr.bf16.mxu0 0
      %895 = vmatmul.mubr.bf16.gmra.mrb[0].mxu0 %v724
      %v896 = vpop.f32.mrb[0].mxu0
      %v897 = vadd.f32 %v733, %v896
      %v898 = vpop.f32.mrb[0].mxu0
      %v899 = vpop.f32.mrb[0].mxu0
      %v900 = vadd.f32 %v733, %v899
      %v901 = vpop.f32.mrb[0].mxu0
      %902 = vmatprep.mubr.bf16.mxu0 0
      %903 = vmatmul.mubr.bf16.gmra.mrb[0].mxu0 %v725
      %v904 = vpop.f32.mrb[0].mxu0
      %v905 = vadd.f32 %v733, %v904
      %v906 = vpop.f32.mrb[0].mxu0
      %v907 = vpop.f32.mrb[0].mxu0
      %v908 = vadd.f32 %v733, %v907
      %v909 = vpop.f32.mrb[0].mxu0
      %910 = vmatprep.mubr.bf16.mxu0 0
      %911 = vmatmul.mubr.bf16.gmra.mrb[0].mxu0 %v726
      %v912 = vpop.f32.mrb[0].mxu0
      %v913 = vadd.f32 %v733, %v912
      %v914 = vpop.f32.mrb[0].mxu0
      %v915 = vpop.f32.mrb[0].mxu0
      %v916 = vadd.f32 %v733, %v915
      %v917 = vpop.f32.mrb[0].mxu0
      %918 = vmatprep.mubr.bf16.mxu0 0
      %919 = vmatmul.mubr.bf16.gmra.mrb[0].mxu0 %v727
      %v920 = vpop.f32.mrb[0].mxu0
      %v921 = vadd.f32 %v733, %v920
      %v922 = vpop.f32.mrb[0].mxu0
      %v923 = vpop.f32.mrb[0].mxu0
      %v924 = vadd.f32 %v733, %v923
      %v925 = vpop.f32.mrb[0].mxu0
      %926 = vmatprep.mubr.bf16.mxu0 0
      %927 = vmatmul.mubr.bf16.gmra.mrb[0].mxu0 %v728
      %v928 = vpop.f32.mrb[0].mxu0
      %v929 = vadd.f32 %v733, %v928
      %v930 = vpop.f32.mrb[0].mxu0
      %v931 = vpop.f32.mrb[0].mxu0
      %v932 = vadd.f32 %v733, %v931
      %v933 = vpop.f32.mrb[0].mxu0
      %934 = vmatprep.mubr.bf16.mxu0 0
      %935 = vmatmul.mubr.bf16.gmra.mrb[0].mxu0 %v729
      %v936 = vpop.f32.mrb[0].mxu0
      %v937 = vadd.f32 %v733, %v936
      %v938 = vpop.f32.mrb[0].mxu0
      %v939 = vpop.f32.mrb[0].mxu0
      %v940 = vadd.f32 %v733, %v939
      %v941 = vpop.f32.mrb[0].mxu0
      %942 = vdwg.mxu0
      %v943 = vtanh.pop %v817
      %v944 = vtanh.pop %v820
      %v945 = vtanh.pop %v825
      %v946 = vtanh.pop %v828
      %v947 = vtanh.pop %v833
      %v948 = vtanh.pop %v836
      %v949 = vtanh.pop %v841
      %v950 = vtanh.pop %v844
      %v951 = vtanh.pop %v849
      %v952 = vtanh.pop %v852
      %v953 = vtanh.pop %v857
      %v954 = vtanh.pop %v860
      %v955 = vtanh.pop %v865
      %v956 = vtanh.pop %v868
      %v957 = vtanh.pop %v873
      %v958 = vtanh.pop %v876
      %v959 = vtanh.pop %v881
      %v960 = vtanh.pop %v884
      %v961 = vtanh.pop %v889
      %v962 = vtanh.pop %v892
      %v963 = vtanh.pop %v897
      %v964 = vtanh.pop %v900
      %v965 = vtanh.pop %v905
      %v966 = vtanh.pop %v908
      %v967 = vtanh.pop %v913
      %v968 = vtanh.pop %v916
      %v969 = vtanh.pop %v921
      %v970 = vtanh.pop %v924
      %v971 = vtanh.pop %v929
      %v972 = vtanh.pop %v932
      %v973 = vtanh.pop %v937
      %v974 = vtanh.pop %v940
      %v975 = vpack.c.bf16 %v944, %v943
      %v976 = vpack.c.bf16 %v946, %v945
      %v977 = vpack.c.bf16 %v948, %v947
      %v978 = vpack.c.bf16 %v950, %v949
      %v979 = vpack.c.bf16 %v952, %v951
      %v980 = vpack.c.bf16 %v954, %v953
      %v981 = vpack.c.bf16 %v956, %v955
      %v982 = vpack.c.bf16 %v958, %v957
      %v983 = vpack.c.bf16 %v960, %v959
      %v984 = vpack.c.bf16 %v962, %v961
      %v985 = vpack.c.bf16 %v964, %v963
      %v986 = vpack.c.bf16 %v966, %v965
      %v987 = vpack.c.bf16 %v968, %v967
      %v988 = vpack.c.bf16 %v970, %v969
      %v989 = vpack.c.bf16 %v972, %v971
      %v990 = vpack.c.bf16 %v974, %v973
      %v991 = vlaneseq
      %v992 = vshrl.u32 %v991, 7
      %v993 = vsub.s32 0, %v992
      %v994 = vrot.slane %v375, %v993
      %v1011 = vunpack.c.l.b16 %v357
      %v1012 = vunpack.c.l.b16 %v358
      %v1013 = vunpack.c.l.b16 %v359
      %v1014 = vunpack.c.l.b16 %v360
      %v1015 = vunpack.c.l.b16 %v361
      %v1016 = vunpack.c.l.b16 %v362
      %v1017 = vunpack.c.l.b16 %v363
      %v1018 = vunpack.c.l.b16 %v364
      %v1019 = vunpack.c.l.b16 %v365
      %v1020 = vunpack.c.l.b16 %v366
      %v1021 = vunpack.c.l.b16 %v367
      %v1022 = vunpack.c.l.b16 %v368
      %v1023 = vunpack.c.l.b16 %v369
      %v1024 = vunpack.c.l.b16 %v370
      %v1025 = vunpack.c.l.b16 %v371
      %v1026 = vunpack.c.l.b16 %v372
      %v1027 = vpack.c.b16 %v1012, %v1011
      %v1028 = vpack.c.b16 %v1014, %v1013
      %v1029 = vpack.c.b16 %v1016, %v1015
      %v1030 = vpack.c.b16 %v1018, %v1017
      %v1031 = vpack.c.b16 %v1020, %v1019
      %v1032 = vpack.c.b16 %v1022, %v1021
      %v1033 = vpack.c.b16 %v1024, %v1023
      %v1034 = vpack.c.b16 %v1026, %v1025
      %1043 = vmatprep.subr.bf16.mxu0 0
      %1044 = vmatpush1.bf16.msra.mxu0 %v1027
      %1045 = vmatprep.subr.bf16.mxu0 0
      %1046 = vmatpush1.bf16.msra.mxu0 %v1028
      %1047 = vmatprep.subr.bf16.mxu0 0
      %1048 = vmatpush1.bf16.msra.mxu0 %v1029
      %1049 = vmatprep.subr.bf16.mxu0 0
      %1050 = vmatpush1.bf16.msra.mxu0 %v1030
      %1051 = vmatprep.subr.bf16.mxu0 0
      %1052 = vmatpush1.bf16.msra.mxu0 %v1031
      %1053 = vmatprep.subr.bf16.mxu0 0
      %1054 = vmatpush1.bf16.msra.mxu0 %v1032
      %1055 = vmatprep.subr.bf16.mxu0 0
      %1056 = vmatpush1.bf16.msra.mxu0 %v1033
      %1057 = vmatprep.subr.bf16.mxu0 0
      %1058 = vmatpush1.bf16.msra.mxu0 %v1034
      %1059 = vmatprep.subr.bf16.mxu0 0
      %1060 = vmatpush1.bf16.msra.mxu0 0
      %1061 = vmatprep.subr.bf16.mxu0 0
      %1062 = vmatpush1.bf16.msra.mxu0 0
      %1063 = vmatprep.subr.bf16.mxu0 0
      %1064 = vmatpush1.bf16.msra.mxu0 0
      %1065 = vmatprep.subr.bf16.mxu0 0
      %1066 = vmatpush1.bf16.msra.mxu0 0
      %1067 = vmatprep.subr.bf16.mxu0 0
      %1068 = vmatpush1.bf16.msra.mxu0 0
      %1069 = vmatprep.subr.bf16.mxu0 0
      %1070 = vmatpush1.bf16.msra.mxu0 0
      %1071 = vmatprep.subr.bf16.mxu0 0
      %1072 = vmatpush1.bf16.msra.mxu0 0
      %1073 = vmatprep.subr.bf16.mxu0 0
      %1074 = vmatpush1.bf16.msra.mxu0 0
      %1075 = vmatprep.mubr.bf16.mxu0 0
      %1076 = vmatmul.mubr.bf16.gmra.mrb[0].mxu0 %v975
      %v1077 = vpop.f32.mrb[0].mxu0
      %v1078 = vadd.f32 %v994, %v1077
      %v1079 = vpop.f32.mrb[0].mxu0
      %v1080 = vpop.f32.mrb[0].mxu0
      %v1081 = vadd.f32 %v994, %v1080
      %v1082 = vpop.f32.mrb[0].mxu0
      %1083 = vmatprep.mubr.bf16.mxu0 0
      %1084 = vmatmul.mubr.bf16.gmra.mrb[0].mxu0 %v976
      %v1085 = vpop.f32.mrb[0].mxu0
      %v1086 = vadd.f32 %v994, %v1085
      %v1087 = vpop.f32.mrb[0].mxu0
      %v1088 = vpop.f32.mrb[0].mxu0
      %v1089 = vadd.f32 %v994, %v1088
      %v1090 = vpop.f32.mrb[0].mxu0
      %1091 = vmatprep.mubr.bf16.mxu0 0
      %1092 = vmatmul.mubr.bf16.gmra.mrb[0].mxu0 %v977
      %v1093 = vpop.f32.mrb[0].mxu0
      %v1094 = vadd.f32 %v994, %v1093
      %v1095 = vpop.f32.mrb[0].mxu0
      %v1096 = vpop.f32.mrb[0].mxu0
      %v1097 = vadd.f32 %v994, %v1096
      %v1098 = vpop.f32.mrb[0].mxu0
      %1099 = vmatprep.mubr.bf16.mxu0 0
      %1100 = vmatmul.mubr.bf16.gmra.mrb[0].mxu0 %v978
      %v1101 = vpop.f32.mrb[0].mxu0
      %v1102 = vadd.f32 %v994, %v1101
      %v1103 = vpop.f32.mrb[0].mxu0
      %v1104 = vpop.f32.mrb[0].mxu0
      %v1105 = vadd.f32 %v994, %v1104
      %v1106 = vpop.f32.mrb[0].mxu0
      %1107 = vmatprep.mubr.bf16.mxu0 0
      %1108 = vmatmul.mubr.bf16.gmra.mrb[0].mxu0 %v979
      %v1109 = vpop.f32.mrb[0].mxu0
      %v1110 = vadd.f32 %v994, %v1109
      %v1111 = vpop.f32.mrb[0].mxu0
      %v1112 = vpop.f32.mrb[0].mxu0
      %v1113 = vadd.f32 %v994, %v1112
      %v1114 = vpop.f32.mrb[0].mxu0
      %1115 = vmatprep.mubr.bf16.mxu0 0
      %1116 = vmatmul.mubr.bf16.gmra.mrb[0].mxu0 %v980
      %v1117 = vpop.f32.mrb[0].mxu0
      %v1118 = vadd.f32 %v994, %v1117
      %v1119 = vpop.f32.mrb[0].mxu0
      %v1120 = vpop.f32.mrb[0].mxu0
      %v1121 = vadd.f32 %v994, %v1120
      %v1122 = vpop.f32.mrb[0].mxu0
      %1123 = vmatprep.mubr.bf16.mxu0 0
      %1124 = vmatmul.mubr.bf16.gmra.mrb[0].mxu0 %v981
      %v1125 = vpop.f32.mrb[0].mxu0
      %v1126 = vadd.f32 %v994, %v1125
      %v1127 = vpop.f32.mrb[0].mxu0
      %v1128 = vpop.f32.mrb[0].mxu0
      %v1129 = vadd.f32 %v994, %v1128
      %v1130 = vpop.f32.mrb[0].mxu0
      %1131 = vmatprep.mubr.bf16.mxu0 0
      %1132 = vmatmul.mubr.bf16.gmra.mrb[0].mxu0 %v982
      %v1133 = vpop.f32.mrb[0].mxu0
      %v1134 = vadd.f32 %v994, %v1133
      %v1135 = vpop.f32.mrb[0].mxu0
      %v1136 = vpop.f32.mrb[0].mxu0
      %v1137 = vadd.f32 %v994, %v1136
      %v1138 = vpop.f32.mrb[0].mxu0
      %1139 = vmatprep.mubr.bf16.mxu0 0
      %1140 = vmatmul.mubr.bf16.gmra.mrb[0].mxu0 %v983
      %v1141 = vpop.f32.mrb[0].mxu0
      %v1142 = vadd.f32 %v994, %v1141
      %v1143 = vpop.f32.mrb[0].mxu0
      %v1144 = vpop.f32.mrb[0].mxu0
      %v1145 = vadd.f32 %v994, %v1144
      %v1146 = vpop.f32.mrb[0].mxu0
      %1147 = vmatprep.mubr.bf16.mxu0 0
      %1148 = vmatmul.mubr.bf16.gmra.mrb[0].mxu0 %v984
      %v1149 = vpop.f32.mrb[0].mxu0
      %v1150 = vadd.f32 %v994, %v1149
      %v1151 = vpop.f32.mrb[0].mxu0
      %v1152 = vpop.f32.mrb[0].mxu0
      %v1153 = vadd.f32 %v994, %v1152
      %v1154 = vpop.f32.mrb[0].mxu0
      %1155 = vmatprep.mubr.bf16.mxu0 0
      %1156 = vmatmul.mubr.bf16.gmra.mrb[0].mxu0 %v985
      %v1157 = vpop.f32.mrb[0].mxu0
      %v1158 = vadd.f32 %v994, %v1157
      %v1159 = vpop.f32.mrb[0].mxu0
      %v1160 = vpop.f32.mrb[0].mxu0
      %v1161 = vadd.f32 %v994, %v1160
      %v1162 = vpop.f32.mrb[0].mxu0
      %1163 = vmatprep.mubr.bf16.mxu0 0
      %1164 = vmatmul.mubr.bf16.gmra.mrb[0].mxu0 %v986
      %v1165 = vpop.f32.mrb[0].mxu0
      %v1166 = vadd.f32 %v994, %v1165
      %v1167 = vpop.f32.mrb[0].mxu0
      %v1168 = vpop.f32.mrb[0].mxu0
      %v1169 = vadd.f32 %v994, %v1168
      %v1170 = vpop.f32.mrb[0].mxu0
      %1171 = vmatprep.mubr.bf16.mxu0 0
      %1172 = vmatmul.mubr.bf16.gmra.mrb[0].mxu0 %v987
      %v1173 = vpop.f32.mrb[0].mxu0
      %v1174 = vadd.f32 %v994, %v1173
      %v1175 = vpop.f32.mrb[0].mxu0
      %v1176 = vpop.f32.mrb[0].mxu0
      %v1177 = vadd.f32 %v994, %v1176
      %v1178 = vpop.f32.mrb[0].mxu0
      %1179 = vmatprep.mubr.bf16.mxu0 0
      %1180 = vmatmul.mubr.bf16.gmra.mrb[0].mxu0 %v988
      %v1181 = vpop.f32.mrb[0].mxu0
      %v1182 = vadd.f32 %v994, %v1181
      %v1183 = vpop.f32.mrb[0].mxu0
      %v1184 = vpop.f32.mrb[0].mxu0
      %v1185 = vadd.f32 %v994, %v1184
      %v1186 = vpop.f32.mrb[0].mxu0
      %1187 = vmatprep.mubr.bf16.mxu0 0
      %1188 = vmatmul.mubr.bf16.gmra.mrb[0].mxu0 %v989
      %v1189 = vpop.f32.mrb[0].mxu0
      %v1190 = vadd.f32 %v994, %v1189
      %v1191 = vpop.f32.mrb[0].mxu0
      %v1192 = vpop.f32.mrb[0].mxu0
      %v1193 = vadd.f32 %v994, %v1192
      %v1194 = vpop.f32.mrb[0].mxu0
      %1195 = vmatprep.mubr.bf16.mxu0 0
      %1196 = vmatmul.mubr.bf16.gmra.mrb[0].mxu0 %v990
      %v1197 = vpop.f32.mrb[0].mxu0
      %v1198 = vadd.f32 %v994, %v1197
      %v1199 = vpop.f32.mrb[0].mxu0
      %v1200 = vpop.f32.mrb[0].mxu0
      %v1201 = vadd.f32 %v994, %v1200
      %v1202 = vpop.f32.mrb[0].mxu0
      %1203 = vdwg.mxu0
      %1204 = vst [vmem:[%s290] sm:$0xff] %v1078
      %1205 = vst [vmem:[%s290 + $0x8] sm:$0xff] %v1081
      %1206 = vst [vmem:[%s290 + $0x10] sm:$0xff] %v1086
      %1207 = vst [vmem:[%s290 + $0x18] sm:$0xff] %v1089
      %1208 = vst [vmem:[%s290 + $0x20] sm:$0xff] %v1094
      %1209 = vst [vmem:[%s290 + $0x28] sm:$0xff] %v1097
      %1210 = vst [vmem:[%s290 + $0x30] sm:$0xff] %v1102
      %1211 = vst [vmem:[%s290 + $0x38] sm:$0xff] %v1105
      %1212 = vst [vmem:[%s290 + $0x40] sm:$0xff] %v1110
      %1213 = vst [vmem:[%s290 + $0x48] sm:$0xff] %v1113
      %1214 = vst [vmem:[%s290 + $0x50] sm:$0xff] %v1118
      %1215 = vst [vmem:[%s290 + $0x58] sm:$0xff] %v1121
      %1216 = vst [vmem:[%s290 + $0x60] sm:$0xff] %v1126
      %1217 = vst [vmem:[%s290 + $0x68] sm:$0xff] %v1129
      %1218 = vst [vmem:[%s290 + $0x70] sm:$0xff] %v1134
      %1219 = vst [vmem:[%s290 + $0x78] sm:$0xff] %v1137
      %1220 = vst [vmem:[%s290 + $0x80] sm:$0xff] %v1142
      %1221 = vst [vmem:[%s290 + $0x88] sm:$0xff] %v1145
      %1222 = vst [vmem:[%s290 + $0x90] sm:$0xff] %v1150
      %1223 = vst [vmem:[%s290 + $0x98] sm:$0xff] %v1153
      %1224 = vst [vmem:[%s290 + $0xa0] sm:$0xff] %v1158
      %1225 = vst [vmem:[%s290 + $0xa8] sm:$0xff] %v1161
      %1226 = vst [vmem:[%s290 + $0xb0] sm:$0xff] %v1166
      %1227 = vst [vmem:[%s290 + $0xb8] sm:$0xff] %v1169
      %1228 = vst [vmem:[%s290 + $0xc0] sm:$0xff] %v1174
      %1229 = vst [vmem:[%s290 + $0xc8] sm:$0xff] %v1177
      %1230 = vst [vmem:[%s290 + $0xd0] sm:$0xff] %v1182
      %1231 = vst [vmem:[%s290 + $0xd8] sm:$0xff] %v1185
      %1232 = vst [vmem:[%s290 + $0xe0] sm:$0xff] %v1190
      %1233 = vst [vmem:[%s290 + $0xe8] sm:$0xff] %v1193
      %1234 = vst [vmem:[%s290 + $0xf0] sm:$0xff] %v1198
      %1235 = vst [vmem:[%s290 + $0xf8] sm:$0xff] %v1201
      %1236 = vmax.xlane.f32.xlu0 %v1078
      %v1237 = vpop.xlane.xlu0 %1236
      %1238 = vmax.xlane.f32.xlu0 %v1081
      %v1239 = vpop.xlane.xlu0 %1238
      %1240 = vmax.xlane.f32.xlu0 %v1086
      %v1241 = vpop.xlane.xlu0 %1240
      %1242 = vmax.xlane.f32.xlu0 %v1089
      %v1243 = vpop.xlane.xlu0 %1242
      %1244 = vmax.xlane.f32.xlu0 %v1094
      %v1245 = vpop.xlane.xlu0 %1244
      %1246 = vmax.xlane.f32.xlu0 %v1097
      %v1247 = vpop.xlane.xlu0 %1246
      %1248 = vmax.xlane.f32.xlu0 %v1102
      %v1249 = vpop.xlane.xlu0 %1248
      %1250 = vmax.xlane.f32.xlu0 %v1105
      %v1251 = vpop.xlane.xlu0 %1250
      %1252 = vmax.xlane.f32.xlu0 %v1110
      %v1253 = vpop.xlane.xlu0 %1252
      %1254 = vmax.xlane.f32.xlu0 %v1113
      %v1255 = vpop.xlane.xlu0 %1254
      %1256 = vmax.xlane.f32.xlu0 %v1118
      %v1257 = vpop.xlane.xlu0 %1256
      %1258 = vmax.xlane.f32.xlu0 %v1121
      %v1259 = vpop.xlane.xlu0 %1258
      %1260 = vmax.xlane.f32.xlu0 %v1126
      %v1261 = vpop.xlane.xlu0 %1260
      %1262 = vmax.xlane.f32.xlu0 %v1129
      %v1263 = vpop.xlane.xlu0 %1262
      %1264 = vmax.xlane.f32.xlu0 %v1134
      %v1265 = vpop.xlane.xlu0 %1264
      %1266 = vmax.xlane.f32.xlu0 %v1137
      %v1267 = vpop.xlane.xlu0 %1266
      %1268 = vmax.xlane.f32.xlu0 %v1142
      %v1269 = vpop.xlane.xlu0 %1268
      %1270 = vmax.xlane.f32.xlu0 %v1145
      %v1271 = vpop.xlane.xlu0 %1270
      %1272 = vmax.xlane.f32.xlu0 %v1150
      %v1273 = vpop.xlane.xlu0 %1272
      %1274 = vmax.xlane.f32.xlu0 %v1153
      %v1275 = vpop.xlane.xlu0 %1274
      %1276 = vmax.xlane.f32.xlu0 %v1158
      %v1277 = vpop.xlane.xlu0 %1276
      %1278 = vmax.xlane.f32.xlu0 %v1161
      %v1279 = vpop.xlane.xlu0 %1278
      %1280 = vmax.xlane.f32.xlu0 %v1166
      %v1281 = vpop.xlane.xlu0 %1280
      %1282 = vmax.xlane.f32.xlu0 %v1169
      %v1283 = vpop.xlane.xlu0 %1282
      %1284 = vmax.xlane.f32.xlu0 %v1174
      %v1285 = vpop.xlane.xlu0 %1284
      %1286 = vmax.xlane.f32.xlu0 %v1177
      %v1287 = vpop.xlane.xlu0 %1286
      %1288 = vmax.xlane.f32.xlu0 %v1182
      %v1289 = vpop.xlane.xlu0 %1288
      %1290 = vmax.xlane.f32.xlu0 %v1185
      %v1291 = vpop.xlane.xlu0 %1290
      %1292 = vmax.xlane.f32.xlu0 %v1190
      %v1293 = vpop.xlane.xlu0 %1292
      %1294 = vmax.xlane.f32.xlu0 %v1193
      %v1295 = vpop.xlane.xlu0 %1294
      %1296 = vmax.xlane.f32.xlu0 %v1198
      %v1297 = vpop.xlane.xlu0 %1296
      %1298 = vmax.xlane.f32.xlu0 %v1201
      %v1299 = vpop.xlane.xlu0 %1298
      %v1300 = vsub.f32 %v1078, %v1237
      %v1301 = vsub.f32 %v1081, %v1239
      %v1302 = vsub.f32 %v1086, %v1241
      %v1303 = vsub.f32 %v1089, %v1243
      %v1304 = vsub.f32 %v1094, %v1245
      %v1305 = vsub.f32 %v1097, %v1247
      %v1306 = vsub.f32 %v1102, %v1249
      %v1307 = vsub.f32 %v1105, %v1251
      %v1308 = vsub.f32 %v1110, %v1253
      %v1309 = vsub.f32 %v1113, %v1255
      %v1310 = vsub.f32 %v1118, %v1257
      %v1311 = vsub.f32 %v1121, %v1259
      %v1312 = vsub.f32 %v1126, %v1261
      %v1313 = vsub.f32 %v1129, %v1263
      %v1314 = vsub.f32 %v1134, %v1265
      %v1315 = vsub.f32 %v1137, %v1267
      %v1316 = vsub.f32 %v1142, %v1269
      %v1317 = vsub.f32 %v1145, %v1271
      %v1318 = vsub.f32 %v1150, %v1273
      %v1319 = vsub.f32 %v1153, %v1275
      %v1320 = vsub.f32 %v1158, %v1277
      %v1321 = vsub.f32 %v1161, %v1279
      %v1322 = vsub.f32 %v1166, %v1281
      %v1323 = vsub.f32 %v1169, %v1283
      %v1324 = vsub.f32 %v1174, %v1285
      %v1325 = vsub.f32 %v1177, %v1287
      %v1326 = vsub.f32 %v1182, %v1289
      %v1327 = vsub.f32 %v1185, %v1291
      %v1328 = vsub.f32 %v1190, %v1293
      %v1329 = vsub.f32 %v1193, %v1295
      %v1330 = vsub.f32 %v1198, %v1297
      %v1331 = vsub.f32 %v1201, %v1299
      %v1332 = vmul.f32 %v1300, 1.442695
      %v1333 = vpow.pop %v1332
      %v1334 = vmul.f32 %v1301, 1.442695
      %v1335 = vpow.pop %v1334
      %v1336 = vmul.f32 %v1302, 1.442695
      %v1337 = vpow.pop %v1336
      %v1338 = vmul.f32 %v1303, 1.442695
      %v1339 = vpow.pop %v1338
      %v1340 = vmul.f32 %v1304, 1.442695
      %v1341 = vpow.pop %v1340
      %v1342 = vmul.f32 %v1305, 1.442695
      %v1343 = vpow.pop %v1342
      %v1344 = vmul.f32 %v1306, 1.442695
      %v1345 = vpow.pop %v1344
      %v1346 = vmul.f32 %v1307, 1.442695
      %v1347 = vpow.pop %v1346
      %v1348 = vmul.f32 %v1308, 1.442695
      %v1349 = vpow.pop %v1348
      %v1350 = vmul.f32 %v1309, 1.442695
      %v1351 = vpow.pop %v1350
      %v1352 = vmul.f32 %v1310, 1.442695
      %v1353 = vpow.pop %v1352
      %v1354 = vmul.f32 %v1311, 1.442695
      %v1355 = vpow.pop %v1354
      %v1356 = vmul.f32 %v1312, 1.442695
      %v1357 = vpow.pop %v1356
      %v1358 = vmul.f32 %v1313, 1.442695
      %v1359 = vpow.pop %v1358
      %v1360 = vmul.f32 %v1314, 1.442695
      %v1361 = vpow.pop %v1360
      %v1362 = vmul.f32 %v1315, 1.442695
      %v1363 = vpow.pop %v1362
      %v1364 = vmul.f32 %v1316, 1.442695
      %v1365 = vpow.pop %v1364
      %v1366 = vmul.f32 %v1317, 1.442695
      %v1367 = vpow.pop %v1366
      %v1368 = vmul.f32 %v1318, 1.442695
      %v1369 = vpow.pop %v1368
      %v1370 = vmul.f32 %v1319, 1.442695
      %v1371 = vpow.pop %v1370
      %v1372 = vmul.f32 %v1320, 1.442695
      %v1373 = vpow.pop %v1372
      %v1374 = vmul.f32 %v1321, 1.442695
      %v1375 = vpow.pop %v1374
      %v1376 = vmul.f32 %v1322, 1.442695
      %v1377 = vpow.pop %v1376
      %v1378 = vmul.f32 %v1323, 1.442695
      %v1379 = vpow.pop %v1378
      %v1380 = vmul.f32 %v1324, 1.442695
      %v1381 = vpow.pop %v1380
      %v1382 = vmul.f32 %v1325, 1.442695
      %v1383 = vpow.pop %v1382
      %v1384 = vmul.f32 %v1326, 1.442695
      %v1385 = vpow.pop %v1384
      %v1386 = vmul.f32 %v1327, 1.442695
      %v1387 = vpow.pop %v1386
      %v1388 = vmul.f32 %v1328, 1.442695
      %v1389 = vpow.pop %v1388
      %v1390 = vmul.f32 %v1329, 1.442695
      %v1391 = vpow.pop %v1390
      %v1392 = vmul.f32 %v1330, 1.442695
      %v1393 = vpow.pop %v1392
      %v1394 = vmul.f32 %v1331, 1.442695
      %v1395 = vpow.pop %v1394
      %1396 = vadd.xlane.f32.xlu0 %v1333
      %v1397 = vpop.xlane.xlu0 %1396
      %1398 = vadd.xlane.f32.xlu0 %v1335
      %v1399 = vpop.xlane.xlu0 %1398
      %1400 = vadd.xlane.f32.xlu0 %v1337
      %v1401 = vpop.xlane.xlu0 %1400
      %1402 = vadd.xlane.f32.xlu0 %v1339
      %v1403 = vpop.xlane.xlu0 %1402
      %1404 = vadd.xlane.f32.xlu0 %v1341
      %v1405 = vpop.xlane.xlu0 %1404
      %1406 = vadd.xlane.f32.xlu0 %v1343
      %v1407 = vpop.xlane.xlu0 %1406
      %1408 = vadd.xlane.f32.xlu0 %v1345
      %v1409 = vpop.xlane.xlu0 %1408
      %1410 = vadd.xlane.f32.xlu0 %v1347
      %v1411 = vpop.xlane.xlu0 %1410
      %1412 = vadd.xlane.f32.xlu0 %v1349
      %v1413 = vpop.xlane.xlu0 %1412
      %1414 = vadd.xlane.f32.xlu0 %v1351
      %v1415 = vpop.xlane.xlu0 %1414
      %1416 = vadd.xlane.f32.xlu0 %v1353
      %v1417 = vpop.xlane.xlu0 %1416
      %1418 = vadd.xlane.f32.xlu0 %v1355
      %v1419 = vpop.xlane.xlu0 %1418
      %1420 = vadd.xlane.f32.xlu0 %v1357
      %v1421 = vpop.xlane.xlu0 %1420
      %1422 = vadd.xlane.f32.xlu0 %v1359
      %v1423 = vpop.xlane.xlu0 %1422
      %1424 = vadd.xlane.f32.xlu0 %v1361
      %v1425 = vpop.xlane.xlu0 %1424
      %1426 = vadd.xlane.f32.xlu0 %v1363
      %v1427 = vpop.xlane.xlu0 %1426
      %1428 = vadd.xlane.f32.xlu0 %v1365
      %v1429 = vpop.xlane.xlu0 %1428
      %1430 = vadd.xlane.f32.xlu0 %v1367
      %v1431 = vpop.xlane.xlu0 %1430
      %1432 = vadd.xlane.f32.xlu0 %v1369
      %v1433 = vpop.xlane.xlu0 %1432
      %1434 = vadd.xlane.f32.xlu0 %v1371
      %v1435 = vpop.xlane.xlu0 %1434
      %1436 = vadd.xlane.f32.xlu0 %v1373
      %v1437 = vpop.xlane.xlu0 %1436
      %1438 = vadd.xlane.f32.xlu0 %v1375
      %v1439 = vpop.xlane.xlu0 %1438
      %1440 = vadd.xlane.f32.xlu0 %v1377
      %v1441 = vpop.xlane.xlu0 %1440
      %1442 = vadd.xlane.f32.xlu0 %v1379
      %v1443 = vpop.xlane.xlu0 %1442
      %1444 = vadd.xlane.f32.xlu0 %v1381
      %v1445 = vpop.xlane.xlu0 %1444
      %1446 = vadd.xlane.f32.xlu0 %v1383
      %v1447 = vpop.xlane.xlu0 %1446
      %1448 = vadd.xlane.f32.xlu0 %v1385
      %v1449 = vpop.xlane.xlu0 %1448
      %1450 = vadd.xlane.f32.xlu0 %v1387
      %v1451 = vpop.xlane.xlu0 %1450
      %1452 = vadd.xlane.f32.xlu0 %v1389
      %v1453 = vpop.xlane.xlu0 %1452
      %1454 = vadd.xlane.f32.xlu0 %v1391
      %v1455 = vpop.xlane.xlu0 %1454
      %1456 = vadd.xlane.f32.xlu0 %v1393
      %v1457 = vpop.xlane.xlu0 %1456
      %1458 = vadd.xlane.f32.xlu0 %v1395
      %v1459 = vpop.xlane.xlu0 %1458
      %v1460 = vrcp.pop %v1397
      %v1461 = vrcp.pop %v1399
      %v1462 = vrcp.pop %v1401
      %v1463 = vrcp.pop %v1403
      %v1464 = vrcp.pop %v1405
      %v1465 = vrcp.pop %v1407
      %v1466 = vrcp.pop %v1409
      %v1467 = vrcp.pop %v1411
      %v1468 = vrcp.pop %v1413
      %v1469 = vrcp.pop %v1415
      %v1470 = vrcp.pop %v1417
      %v1471 = vrcp.pop %v1419
      %v1472 = vrcp.pop %v1421
      %v1473 = vrcp.pop %v1423
      %v1474 = vrcp.pop %v1425
      %v1475 = vrcp.pop %v1427
      %v1476 = vrcp.pop %v1429
      %v1477 = vrcp.pop %v1431
      %v1478 = vrcp.pop %v1433
      %v1479 = vrcp.pop %v1435
      %v1480 = vrcp.pop %v1437
      %v1481 = vrcp.pop %v1439
      %v1482 = vrcp.pop %v1441
      %v1483 = vrcp.pop %v1443
      %v1484 = vrcp.pop %v1445
      %v1485 = vrcp.pop %v1447
      %v1486 = vrcp.pop %v1449
      %v1487 = vrcp.pop %v1451
      %v1488 = vrcp.pop %v1453
      %v1489 = vrcp.pop %v1455
      %v1490 = vrcp.pop %v1457
      %v1491 = vrcp.pop %v1459
      %v1492 = vmul.f32 %v1333, %v1460
      %v1493 = vmul.f32 %v1335, %v1461
      %v1494 = vmul.f32 %v1337, %v1462
      %v1495 = vmul.f32 %v1339, %v1463
      %v1496 = vmul.f32 %v1341, %v1464
      %v1497 = vmul.f32 %v1343, %v1465
      %v1498 = vmul.f32 %v1345, %v1466
      %v1499 = vmul.f32 %v1347, %v1467
      %v1500 = vmul.f32 %v1349, %v1468
      %v1501 = vmul.f32 %v1351, %v1469
      %v1502 = vmul.f32 %v1353, %v1470
      %v1503 = vmul.f32 %v1355, %v1471
      %v1504 = vmul.f32 %v1357, %v1472
      %v1505 = vmul.f32 %v1359, %v1473
      %v1506 = vmul.f32 %v1361, %v1474
      %v1507 = vmul.f32 %v1363, %v1475
      %v1508 = vmul.f32 %v1365, %v1476
      %v1509 = vmul.f32 %v1367, %v1477
      %v1510 = vmul.f32 %v1369, %v1478
      %v1511 = vmul.f32 %v1371, %v1479
      %v1512 = vmul.f32 %v1373, %v1480
      %v1513 = vmul.f32 %v1375, %v1481
      %v1514 = vmul.f32 %v1377, %v1482
      %v1515 = vmul.f32 %v1379, %v1483
      %v1516 = vmul.f32 %v1381, %v1484
      %v1517 = vmul.f32 %v1383, %v1485
      %v1518 = vmul.f32 %v1385, %v1486
      %v1519 = vmul.f32 %v1387, %v1487
      %v1520 = vmul.f32 %v1389, %v1488
      %v1521 = vmul.f32 %v1391, %v1489
      %v1522 = vmul.f32 %v1393, %v1490
      %v1523 = vmul.f32 %v1395, %v1491
      %1524 = vst [vmem:[%s296] sm:$0xff] %v1492
      %1525 = vst [vmem:[%s296 + $0x8] sm:$0xff] %v1493
      %1526 = vst [vmem:[%s296 + $0x10] sm:$0xff] %v1494
      %1527 = vst [vmem:[%s296 + $0x18] sm:$0xff] %v1495
      %1528 = vst [vmem:[%s296 + $0x20] sm:$0xff] %v1496
      %1529 = vst [vmem:[%s296 + $0x28] sm:$0xff] %v1497
      %1530 = vst [vmem:[%s296 + $0x30] sm:$0xff] %v1498
      %1531 = vst [vmem:[%s296 + $0x38] sm:$0xff] %v1499
      %1532 = vst [vmem:[%s296 + $0x40] sm:$0xff] %v1500
      %1533 = vst [vmem:[%s296 + $0x48] sm:$0xff] %v1501
      %1534 = vst [vmem:[%s296 + $0x50] sm:$0xff] %v1502
      %1535 = vst [vmem:[%s296 + $0x58] sm:$0xff] %v1503
      %1536 = vst [vmem:[%s296 + $0x60] sm:$0xff] %v1504
      %1537 = vst [vmem:[%s296 + $0x68] sm:$0xff] %v1505
      %1538 = vst [vmem:[%s296 + $0x70] sm:$0xff] %v1506
      %1539 = vst [vmem:[%s296 + $0x78] sm:$0xff] %v1507
      %1540 = vst [vmem:[%s296 + $0x80] sm:$0xff] %v1508
      %1541 = vst [vmem:[%s296 + $0x88] sm:$0xff] %v1509
      %1542 = vst [vmem:[%s296 + $0x90] sm:$0xff] %v1510
      %1543 = vst [vmem:[%s296 + $0x98] sm:$0xff] %v1511
      %1544 = vst [vmem:[%s296 + $0xa0] sm:$0xff] %v1512
      %1545 = vst [vmem:[%s296 + $0xa8] sm:$0xff] %v1513
      %1546 = vst [vmem:[%s296 + $0xb0] sm:$0xff] %v1514
      %1547 = vst [vmem:[%s296 + $0xb8] sm:$0xff] %v1515
      %1548 = vst [vmem:[%s296 + $0xc0] sm:$0xff] %v1516
      %1549 = vst [vmem:[%s296 + $0xc8] sm:$0xff] %v1517
      %1550 = vst [vmem:[%s296 + $0xd0] sm:$0xff] %v1518
      %1551 = vst [vmem:[%s296 + $0xd8] sm:$0xff] %v1519
      %1552 = vst [vmem:[%s296 + $0xe0] sm:$0xff] %v1520
      %1553 = vst [vmem:[%s296 + $0xe8] sm:$0xff] %v1521
      %1554 = vst [vmem:[%s296 + $0xf0] sm:$0xff] %v1522
      %1555 = vst [vmem:[%s296 + $0xf8] sm:$0xff] %v1523
      %v1556 = vlog2.pop %v1397
      %v1557 = vmul.f32 %v1556, 0.6931472
      %v1558 = vlog2.pop %v1399
      %v1559 = vmul.f32 %v1558, 0.6931472
      %v1560 = vlog2.pop %v1401
      %v1561 = vmul.f32 %v1560, 0.6931472
      %v1562 = vlog2.pop %v1403
      %v1563 = vmul.f32 %v1562, 0.6931472
      %v1564 = vlog2.pop %v1405
      %v1565 = vmul.f32 %v1564, 0.6931472
      %v1566 = vlog2.pop %v1407
      %v1567 = vmul.f32 %v1566, 0.6931472
      %v1568 = vlog2.pop %v1409
      %v1569 = vmul.f32 %v1568, 0.6931472
      %v1570 = vlog2.pop %v1411
      %v1571 = vmul.f32 %v1570, 0.6931472
      %v1572 = vlog2.pop %v1413
      %v1573 = vmul.f32 %v1572, 0.6931472
      %v1574 = vlog2.pop %v1415
      %v1575 = vmul.f32 %v1574, 0.6931472
      %v1576 = vlog2.pop %v1417
      %v1577 = vmul.f32 %v1576, 0.6931472
      %v1578 = vlog2.pop %v1419
      %v1579 = vmul.f32 %v1578, 0.6931472
      %v1580 = vlog2.pop %v1421
      %v1581 = vmul.f32 %v1580, 0.6931472
      %v1582 = vlog2.pop %v1423
      %v1583 = vmul.f32 %v1582, 0.6931472
      %v1584 = vlog2.pop %v1425
      %v1585 = vmul.f32 %v1584, 0.6931472
      %v1586 = vlog2.pop %v1427
      %v1587 = vmul.f32 %v1586, 0.6931472
      %v1588 = vlog2.pop %v1429
      %v1589 = vmul.f32 %v1588, 0.6931472
      %v1590 = vlog2.pop %v1431
      %v1591 = vmul.f32 %v1590, 0.6931472
      %v1592 = vlog2.pop %v1433
      %v1593 = vmul.f32 %v1592, 0.6931472
      %v1594 = vlog2.pop %v1435
      %v1595 = vmul.f32 %v1594, 0.6931472
      %v1596 = vlog2.pop %v1437
      %v1597 = vmul.f32 %v1596, 0.6931472
      %v1598 = vlog2.pop %v1439
      %v1599 = vmul.f32 %v1598, 0.6931472
      %v1600 = vlog2.pop %v1441
      %v1601 = vmul.f32 %v1600, 0.6931472
      %v1602 = vlog2.pop %v1443
      %v1603 = vmul.f32 %v1602, 0.6931472
      %v1604 = vlog2.pop %v1445
      %v1605 = vmul.f32 %v1604, 0.6931472
      %v1606 = vlog2.pop %v1447
      %v1607 = vmul.f32 %v1606, 0.6931472
      %v1608 = vlog2.pop %v1449
      %v1609 = vmul.f32 %v1608, 0.6931472
      %v1610 = vlog2.pop %v1451
      %v1611 = vmul.f32 %v1610, 0.6931472
      %v1612 = vlog2.pop %v1453
      %v1613 = vmul.f32 %v1612, 0.6931472
      %v1614 = vlog2.pop %v1455
      %v1615 = vmul.f32 %v1614, 0.6931472
      %v1616 = vlog2.pop %v1457
      %v1617 = vmul.f32 %v1616, 0.6931472
      %v1618 = vlog2.pop %v1459
      %v1619 = vmul.f32 %v1618, 0.6931472
      %v1620 = vsub.f32 %v1300, %v1557
      %v1621 = vsub.f32 %v1301, %v1559
      %v1622 = vsub.f32 %v1302, %v1561
      %v1623 = vsub.f32 %v1303, %v1563
      %v1624 = vsub.f32 %v1304, %v1565
      %v1625 = vsub.f32 %v1305, %v1567
      %v1626 = vsub.f32 %v1306, %v1569
      %v1627 = vsub.f32 %v1307, %v1571
      %v1628 = vsub.f32 %v1308, %v1573
      %v1629 = vsub.f32 %v1309, %v1575
      %v1630 = vsub.f32 %v1310, %v1577
      %v1631 = vsub.f32 %v1311, %v1579
      %v1632 = vsub.f32 %v1312, %v1581
      %v1633 = vsub.f32 %v1313, %v1583
      %v1634 = vsub.f32 %v1314, %v1585
      %v1635 = vsub.f32 %v1315, %v1587
      %v1636 = vsub.f32 %v1316, %v1589
      %v1637 = vsub.f32 %v1317, %v1591
      %v1638 = vsub.f32 %v1318, %v1593
      %v1639 = vsub.f32 %v1319, %v1595
      %v1640 = vsub.f32 %v1320, %v1597
      %v1641 = vsub.f32 %v1321, %v1599
      %v1642 = vsub.f32 %v1322, %v1601
      %v1643 = vsub.f32 %v1323, %v1603
      %v1644 = vsub.f32 %v1324, %v1605
      %v1645 = vsub.f32 %v1325, %v1607
      %v1646 = vsub.f32 %v1326, %v1609
      %v1647 = vsub.f32 %v1327, %v1611
      %v1648 = vsub.f32 %v1328, %v1613
      %v1649 = vsub.f32 %v1329, %v1615
      %v1650 = vsub.f32 %v1330, %v1617
      %v1651 = vsub.f32 %v1331, %v1619
      %v1652 = vld [vmem:[%s284] sm:$0xff]
      %v1653 = vld [vmem:[%s284 + $0x8] sm:$0xff]
      %v1654 = vld [vmem:[%s284 + $0x10] sm:$0xff]
      %v1655 = vld [vmem:[%s284 + $0x18] sm:$0xff]
      %v1656 = vld [vmem:[%s284 + $0x20] sm:$0xff]
      %v1657 = vld [vmem:[%s284 + $0x28] sm:$0xff]
      %v1658 = vld [vmem:[%s284 + $0x30] sm:$0xff]
      %v1659 = vld [vmem:[%s284 + $0x38] sm:$0xff]
      %v1660 = vld [vmem:[%s284 + $0x40] sm:$0xff]
      %v1661 = vld [vmem:[%s284 + $0x48] sm:$0xff]
      %v1662 = vld [vmem:[%s284 + $0x50] sm:$0xff]
      %v1663 = vld [vmem:[%s284 + $0x58] sm:$0xff]
      %v1664 = vld [vmem:[%s284 + $0x60] sm:$0xff]
      %v1665 = vld [vmem:[%s284 + $0x68] sm:$0xff]
      %v1666 = vld [vmem:[%s284 + $0x70] sm:$0xff]
      %v1667 = vld [vmem:[%s284 + $0x78] sm:$0xff]
      %v1668 = vld [vmem:[%s284 + $0x80] sm:$0xff]
      %v1669 = vld [vmem:[%s284 + $0x88] sm:$0xff]
      %v1670 = vld [vmem:[%s284 + $0x90] sm:$0xff]
      %v1671 = vld [vmem:[%s284 + $0x98] sm:$0xff]
      %v1672 = vld [vmem:[%s284 + $0xa0] sm:$0xff]
      %v1673 = vld [vmem:[%s284 + $0xa8] sm:$0xff]
      %v1674 = vld [vmem:[%s284 + $0xb0] sm:$0xff]
      %v1675 = vld [vmem:[%s284 + $0xb8] sm:$0xff]
      %v1676 = vld [vmem:[%s284 + $0xc0] sm:$0xff]
      %v1677 = vld [vmem:[%s284 + $0xc8] sm:$0xff]
      %v1678 = vld [vmem:[%s284 + $0xd0] sm:$0xff]
      %v1679 = vld [vmem:[%s284 + $0xd8] sm:$0xff]
      %v1680 = vld [vmem:[%s284 + $0xe0] sm:$0xff]
      %v1681 = vld [vmem:[%s284 + $0xe8] sm:$0xff]
      %v1682 = vld [vmem:[%s284 + $0xf0] sm:$0xff]
      %v1683 = vld [vmem:[%s284 + $0xf8] sm:$0xff]
      %v1684 = vmul.f32 %v1652, %v1620
      %v1685 = vmul.f32 %v1653, %v1621
      %v1686 = vmul.f32 %v1654, %v1622
      %v1687 = vmul.f32 %v1655, %v1623
      %v1688 = vmul.f32 %v1656, %v1624
      %v1689 = vmul.f32 %v1657, %v1625
      %v1690 = vmul.f32 %v1658, %v1626
      %v1691 = vmul.f32 %v1659, %v1627
      %v1692 = vmul.f32 %v1660, %v1628
      %v1693 = vmul.f32 %v1661, %v1629
      %v1694 = vmul.f32 %v1662, %v1630
      %v1695 = vmul.f32 %v1663, %v1631
      %v1696 = vmul.f32 %v1664, %v1632
      %v1697 = vmul.f32 %v1665, %v1633
      %v1698 = vmul.f32 %v1666, %v1634
      %v1699 = vmul.f32 %v1667, %v1635
      %v1700 = vmul.f32 %v1668, %v1636
      %v1701 = vmul.f32 %v1669, %v1637
      %v1702 = vmul.f32 %v1670, %v1638
      %v1703 = vmul.f32 %v1671, %v1639
      %v1704 = vmul.f32 %v1672, %v1640
      %v1705 = vmul.f32 %v1673, %v1641
      %v1706 = vmul.f32 %v1674, %v1642
      %v1707 = vmul.f32 %v1675, %v1643
      %v1708 = vmul.f32 %v1676, %v1644
      %v1709 = vmul.f32 %v1677, %v1645
      %v1710 = vmul.f32 %v1678, %v1646
      %v1711 = vmul.f32 %v1679, %v1647
      %v1712 = vmul.f32 %v1680, %v1648
      %v1713 = vmul.f32 %v1681, %v1649
      %v1714 = vmul.f32 %v1682, %v1650
      %v1715 = vmul.f32 %v1683, %v1651
      %vm1716 = vcmask 23552
      %v1717 = vsel %vm1716, %v1684, 0.0
      %1718 = vadd.xlane.f32.xlu0 %v1717
      %v1719 = vpop.xlane.xlu0 %1718
      %v1720 = vsel %vm1716, %v1685, 0.0
      %1721 = vadd.xlane.f32.xlu0 %v1720
      %v1722 = vpop.xlane.xlu0 %1721
      %v1723 = vsel %vm1716, %v1686, 0.0
      %1724 = vadd.xlane.f32.xlu0 %v1723
      %v1725 = vpop.xlane.xlu0 %1724
      %v1726 = vsel %vm1716, %v1687, 0.0
      %1727 = vadd.xlane.f32.xlu0 %v1726
      %v1728 = vpop.xlane.xlu0 %1727
      %v1729 = vsel %vm1716, %v1688, 0.0
      %1730 = vadd.xlane.f32.xlu0 %v1729
      %v1731 = vpop.xlane.xlu0 %1730
      %v1732 = vsel %vm1716, %v1689, 0.0
      %1733 = vadd.xlane.f32.xlu0 %v1732
      %v1734 = vpop.xlane.xlu0 %1733
      %v1735 = vsel %vm1716, %v1690, 0.0
      %1736 = vadd.xlane.f32.xlu0 %v1735
      %v1737 = vpop.xlane.xlu0 %1736
      %v1738 = vsel %vm1716, %v1691, 0.0
      %1739 = vadd.xlane.f32.xlu0 %v1738
      %v1740 = vpop.xlane.xlu0 %1739
      %v1741 = vsel %vm1716, %v1692, 0.0
      %1742 = vadd.xlane.f32.xlu0 %v1741
      %v1743 = vpop.xlane.xlu0 %1742
      %v1744 = vsel %vm1716, %v1693, 0.0
      %1745 = vadd.xlane.f32.xlu0 %v1744
      %v1746 = vpop.xlane.xlu0 %1745
      %v1747 = vsel %vm1716, %v1694, 0.0
      %1748 = vadd.xlane.f32.xlu0 %v1747
      %v1749 = vpop.xlane.xlu0 %1748
      %v1750 = vsel %vm1716, %v1695, 0.0
      %1751 = vadd.xlane.f32.xlu0 %v1750
      %v1752 = vpop.xlane.xlu0 %1751
      %v1753 = vsel %vm1716, %v1696, 0.0
      %1754 = vadd.xlane.f32.xlu0 %v1753
      %v1755 = vpop.xlane.xlu0 %1754
      %v1756 = vsel %vm1716, %v1697, 0.0
      %1757 = vadd.xlane.f32.xlu0 %v1756
      %v1758 = vpop.xlane.xlu0 %1757
      %v1759 = vsel %vm1716, %v1698, 0.0
      %1760 = vadd.xlane.f32.xlu0 %v1759
      %v1761 = vpop.xlane.xlu0 %1760
      %v1762 = vsel %vm1716, %v1699, 0.0
      %1763 = vadd.xlane.f32.xlu0 %v1762
      %v1764 = vpop.xlane.xlu0 %1763
      %v1765 = vsel %vm1716, %v1700, 0.0
      %1766 = vadd.xlane.f32.xlu0 %v1765
      %v1767 = vpop.xlane.xlu0 %1766
      %v1768 = vsel %vm1716, %v1701, 0.0
      %1769 = vadd.xlane.f32.xlu0 %v1768
      %v1770 = vpop.xlane.xlu0 %1769
      %v1771 = vsel %vm1716, %v1702, 0.0
      %1772 = vadd.xlane.f32.xlu0 %v1771
      %v1773 = vpop.xlane.xlu0 %1772
      %v1774 = vsel %vm1716, %v1703, 0.0
      %1775 = vadd.xlane.f32.xlu0 %v1774
      %v1776 = vpop.xlane.xlu0 %1775
      %v1777 = vsel %vm1716, %v1704, 0.0
      %1778 = vadd.xlane.f32.xlu0 %v1777
      %v1779 = vpop.xlane.xlu0 %1778
      %v1780 = vsel %vm1716, %v1705, 0.0
      %1781 = vadd.xlane.f32.xlu0 %v1780
      %v1782 = vpop.xlane.xlu0 %1781
      %v1783 = vsel %vm1716, %v1706, 0.0
      %1784 = vadd.xlane.f32.xlu0 %v1783
      %v1785 = vpop.xlane.xlu0 %1784
      %v1786 = vsel %vm1716, %v1707, 0.0
      %1787 = vadd.xlane.f32.xlu0 %v1786
      %v1788 = vpop.xlane.xlu0 %1787
      %v1789 = vsel %vm1716, %v1708, 0.0
      %1790 = vadd.xlane.f32.xlu0 %v1789
      %v1791 = vpop.xlane.xlu0 %1790
      %v1792 = vsel %vm1716, %v1709, 0.0
      %1793 = vadd.xlane.f32.xlu0 %v1792
      %v1794 = vpop.xlane.xlu0 %1793
      %v1795 = vsel %vm1716, %v1710, 0.0
      %1796 = vadd.xlane.f32.xlu0 %v1795
      %v1797 = vpop.xlane.xlu0 %1796
      %v1798 = vsel %vm1716, %v1711, 0.0
      %1799 = vadd.xlane.f32.xlu0 %v1798
      %v1800 = vpop.xlane.xlu0 %1799
      %v1801 = vsel %vm1716, %v1712, 0.0
      %1802 = vadd.xlane.f32.xlu0 %v1801
      %v1803 = vpop.xlane.xlu0 %1802
      %v1804 = vsel %vm1716, %v1713, 0.0
      %1805 = vadd.xlane.f32.xlu0 %v1804
      %v1806 = vpop.xlane.xlu0 %1805
      %v1807 = vsel %vm1716, %v1714, 0.0
      %1808 = vadd.xlane.f32.xlu0 %v1807
      %v1809 = vpop.xlane.xlu0 %1808
      %v1810 = vsel %vm1716, %v1715, 0.0
      %1811 = vadd.xlane.f32.xlu0 %v1810
      %v1812 = vpop.xlane.xlu0 %1811
      %v1813 = vsub.f32 0.0, %v1719
      %v1814 = vsub.f32 0.0, %v1722
      %v1815 = vsub.f32 0.0, %v1725
      %v1816 = vsub.f32 0.0, %v1728
      %v1817 = vsub.f32 0.0, %v1731
      %v1818 = vsub.f32 0.0, %v1734
      %v1819 = vsub.f32 0.0, %v1737
      %v1820 = vsub.f32 0.0, %v1740
      %v1821 = vsub.f32 0.0, %v1743
      %v1822 = vsub.f32 0.0, %v1746
      %v1823 = vsub.f32 0.0, %v1749
      %v1824 = vsub.f32 0.0, %v1752
      %v1825 = vsub.f32 0.0, %v1755
      %v1826 = vsub.f32 0.0, %v1758
      %v1827 = vsub.f32 0.0, %v1761
      %v1828 = vsub.f32 0.0, %v1764
      %v1829 = vsub.f32 0.0, %v1767
      %v1830 = vsub.f32 0.0, %v1770
      %v1831 = vsub.f32 0.0, %v1773
      %v1832 = vsub.f32 0.0, %v1776
      %v1833 = vsub.f32 0.0, %v1779
      %v1834 = vsub.f32 0.0, %v1782
      %v1835 = vsub.f32 0.0, %v1785
      %v1836 = vsub.f32 0.0, %v1788
      %v1837 = vsub.f32 0.0, %v1791
      %v1838 = vsub.f32 0.0, %v1794
      %v1839 = vsub.f32 0.0, %v1797
      %v1840 = vsub.f32 0.0, %v1800
      %v1841 = vsub.f32 0.0, %v1803
      %v1842 = vsub.f32 0.0, %v1806
      %v1843 = vsub.f32 0.0, %v1809
      %v1844 = vsub.f32 0.0, %v1812
      %vm1845 = vcmask 7168
      %1846 = vst.msk [vmem:[%s302] sm:$0xff] %vm1845, %v1813
      %1847 = vst.msk [vmem:[%s302 + $0x8] sm:$0xff] %vm1845, %v1814
      %1848 = vst.msk [vmem:[%s302 + $0x10] sm:$0xff] %vm1845, %v1815
      %1849 = vst.msk [vmem:[%s302 + $0x18] sm:$0xff] %vm1845, %v1816
      %1850 = vst.msk [vmem:[%s302 + $0x20] sm:$0xff] %vm1845, %v1817
      %1851 = vst.msk [vmem:[%s302 + $0x28] sm:$0xff] %vm1845, %v1818
      %1852 = vst.msk [vmem:[%s302 + $0x30] sm:$0xff] %vm1845, %v1819
      %1853 = vst.msk [vmem:[%s302 + $0x38] sm:$0xff] %vm1845, %v1820
      %1854 = vst.msk [vmem:[%s302 + $0x40] sm:$0xff] %vm1845, %v1821
      %1855 = vst.msk [vmem:[%s302 + $0x48] sm:$0xff] %vm1845, %v1822
      %1856 = vst.msk [vmem:[%s302 + $0x50] sm:$0xff] %vm1845, %v1823
      %1857 = vst.msk [vmem:[%s302 + $0x58] sm:$0xff] %vm1845, %v1824
      %1858 = vst.msk [vmem:[%s302 + $0x60] sm:$0xff] %vm1845, %v1825
      %1859 = vst.msk [vmem:[%s302 + $0x68] sm:$0xff] %vm1845, %v1826
      %1860 = vst.msk [vmem:[%s302 + $0x70] sm:$0xff] %vm1845, %v1827
      %1861 = vst.msk [vmem:[%s302 + $0x78] sm:$0xff] %vm1845, %v1828
      %1862 = vst.msk [vmem:[%s302 + $0x80] sm:$0xff] %vm1845, %v1829
      %1863 = vst.msk [vmem:[%s302 + $0x88] sm:$0xff] %vm1845, %v1830
      %1864 = vst.msk [vmem:[%s302 + $0x90] sm:$0xff] %vm1845, %v1831
      %1865 = vst.msk [vmem:[%s302 + $0x98] sm:$0xff] %vm1845, %v1832
      %1866 = vst.msk [vmem:[%s302 + $0xa0] sm:$0xff] %vm1845, %v1833
      %1867 = vst.msk [vmem:[%s302 + $0xa8] sm:$0xff] %vm1845, %v1834
      %1868 = vst.msk [vmem:[%s302 + $0xb0] sm:$0xff] %vm1845, %v1835
      %1869 = vst.msk [vmem:[%s302 + $0xb8] sm:$0xff] %vm1845, %v1836
      %1870 = vst.msk [vmem:[%s302 + $0xc0] sm:$0xff] %vm1845, %v1837
      %1871 = vst.msk [vmem:[%s302 + $0xc8] sm:$0xff] %vm1845, %v1838
      %1872 = vst.msk [vmem:[%s302 + $0xd0] sm:$0xff] %vm1845, %v1839
      %1873 = vst.msk [vmem:[%s302 + $0xd8] sm:$0xff] %vm1845, %v1840
      %1874 = vst.msk [vmem:[%s302 + $0xe0] sm:$0xff] %vm1845, %v1841
      %1875 = vst.msk [vmem:[%s302 + $0xe8] sm:$0xff] %vm1845, %v1842
      %1876 = vst.msk [vmem:[%s302 + $0xf0] sm:$0xff] %vm1845, %v1843
      %1877 = vst.msk [vmem:[%s302 + $0xf8] sm:$0xff] %vm1845, %v1844
      %s1878 = smul.u32 32, %s18
      %p1879 = scmp.lt.s32.totalorder %s1878, 127
      %s1880 = scalar_select %p1879, %s1878, 127
      %s1881 = smul.addr %s1880, 8
      %s1882 = scalar_lea.vmem %s4, %s1881
      %s1883 = smul.u32 32, %s18
      %p1884 = scmp.lt.s32.totalorder %s1883, 127
      %s1885 = scalar_select %p1884, %s1883, 127
      %s1886 = smul.addr %s1885, 8
      %s1887 = scalar_lea.vmem %s5, %s1886
      %s1888 = smul.u32 32, %s18
      %p1889 = scmp.lt.s32.totalorder %s1888, 127
      %s1890 = scalar_select %p1889, %s1888, 127
      %s1891 = smul.addr %s1890, 8
      %s1892 = scalar_lea.vmem %s6, %s1891
      // Predicated region
      $region37: #{dnn_forward.1} parent=35 // pred_check
        %p1893 = pneg %p130
      $region38: #{dnn_forward.1} parent=35 // pred_check_branch
        %1895 = sbr.rel (%p1893) target = $region40
      $region39: #{dnn_forward.1} parent=35 // pred_region
        %s1896 = smul.u32 32, %s18
      $region40: #{dnn_forward.1} parent=35 // pred_fallthru
        _
      // Predicated region
      $region41: #{dnn_forward.1} parent=35 // pred_check
        %p1897 = pneg %p156
      $region42: #{dnn_forward.1} parent=35 // pred_check_branch
        %1899 = sbr.rel (%p1897) target = $region44
      $region43: #{dnn_forward.1} parent=35 // pred_region
        %s1900 = smul.u32 32, %s18
      $region44: #{dnn_forward.1} parent=35 // pred_fallthru
        _
      // Predicated region
      $region45: #{dnn_forward.1} parent=35 // pred_check
        %p1901 = pneg %p182
      $region46: #{dnn_forward.1} parent=35 // pred_check_branch
        %1903 = sbr.rel (%p1901) target = $region48
      $region47: #{dnn_forward.1} parent=35 // pred_region
        %s1904 = smul.u32 32, %s18
      $region48: #{dnn_forward.1} parent=35 // pred_fallthru
        _
    $region36: #{dnn_forward.1} parent=5 // pred_fallthru
      _
    %p1905 = scmp.le.s32.totalorder 2, %s13
    // Predicated region
    $region49: #{dnn_forward.1} parent=5 // pred_check
      %p1906 = pneg %p1905
    $region50: #{dnn_forward.1} parent=5 // pred_check_branch
      %1908 = sbr.rel (%p1906) target = $region52
    $region51: #{dnn_forward.1} parent=5 // pred_region
      %s1909 = ssub.s32 %s13, 2
      // Predicated region
      $region53: #{dnn_forward.1} parent=51 // pred_check
        %p1910 = pneg %p136
      $region54: #{dnn_forward.1} parent=51 // pred_check_branch
        %1912 = sbr.rel (%p1910) target = $region56
      $region55: #{dnn_forward.1} parent=51 // pred_region
        %s1913 = smul.u32 32, %s19
        %p1914 = scmp.lt.s32.totalorder %s1913, 127
        %s1915 = scalar_select %p1914, %s1913, 127
        %s1916 = smul.addr %s1915, 8
        %s1917 = scalar_lea.vmem %s4, %s1916
      $region56: #{dnn_forward.1} parent=51 // pred_fallthru
        _
      // Predicated region
      $region57: #{dnn_forward.1} parent=51 // pred_check
        %p1918 = pneg %p162
      $region58: #{dnn_forward.1} parent=51 // pred_check_branch
        %1920 = sbr.rel (%p1918) target = $region60
      $region59: #{dnn_forward.1} parent=51 // pred_region
        %s1921 = smul.u32 32, %s19
        %p1922 = scmp.lt.s32.totalorder %s1921, 127
        %s1923 = scalar_select %p1922, %s1921, 127
        %s1924 = smul.addr %s1923, 8
        %s1925 = scalar_lea.vmem %s5, %s1924
      $region60: #{dnn_forward.1} parent=51 // pred_fallthru
        _
      // Predicated region
      $region61: #{dnn_forward.1} parent=51 // pred_check
        %p1926 = pneg %p188
      $region62: #{dnn_forward.1} parent=51 // pred_check_branch
        %1928 = sbr.rel (%p1926) target = $region64
      $region63: #{dnn_forward.1} parent=51 // pred_region
        %s1929 = smul.u32 32, %s19
        %p1930 = scmp.lt.s32.totalorder %s1929, 127
        %s1931 = scalar_select %p1930, %s1929, 127
        %s1932 = smul.addr %s1931, 8
        %s1933 = scalar_lea.vmem %s6, %s1932
      $region64: #{dnn_forward.1} parent=51 // pred_fallthru
        _
    $region52: #{dnn_forward.1} parent=5 // pred_fallthru
      _
  $region6: #{dnn_forward.1} parent=0 // loop_footer
    %s17 = sadd.s32 1, %s13
  $region7: #{dnn_forward.1} parent=0 // loop_footer_branch
    %12 = sbr.rel target = $region3
  $region8: #{dnn_forward.1} parent=0 // loop_exit
    _

</llo_original>
